<compile_context>
chip_gen: v7x
topology: tpu7x:2x2x1
jax: 0.10.0
libtpu: 0.0.40
codegen_flags: <defaults>
</compile_context>

<pallas_src>
import jax
import jax.numpy as jnp
from jax.experimental import pallas as pl
from jax.experimental.pallas import tpu as pltpu


def text_sentiment_kernel(starts_ref, ends_ref, text_ref, embT_ref, w_ref, b_ref,
                          out_ref, counts_ref):
    """Grid = (bag blocks [parallel], token chunks [arbitrary reduction])."""
    t = pl.program_id(1)
    tile_t = text_ref.shape[1]
    b_blk = starts_ref.shape[1]
    v_pad = embT_ref.shape[1]

    @pl.when(t == 0)
    def _init():
        counts_ref[...] = jnp.zeros_like(counts_ref)

    starts = starts_ref[...]                         # (1, B_blk) int32
    ends = ends_ref[...]                             # (1, B_blk) int32
    text = text_ref[...]                             # (1, tile_t) int32 (lane-major)

    # Global token position of each row j of this chunk.
    pos = jax.lax.broadcasted_iota(jnp.int32, (tile_t, b_blk), 0) + t * tile_t
    # Bag membership: position inside [start, end) of each bag (exact 0/1 bf16).
    bag_onehot_t = ((pos >= starts) & (pos < ends)).astype(jnp.bfloat16)   # (tile_t, B_blk)

    # Token one-hot over the (padded) vocabulary, transposed (exact 0/1 bf16).
    vocab_iota = jax.lax.broadcasted_iota(jnp.int32, (v_pad, tile_t), 0)
    tok_onehot_t = (vocab_iota == text).astype(jnp.bfloat16)               # (V_pad, tile_t)

    # Small (tile_t, B_blk) bag matrix is the MXU weight operand; the big vocab
    # one-hot streams on the LHS path.  f32 accumulation in VMEM scratch.
    counts_ref[...] += jnp.dot(tok_onehot_t, bag_onehot_t,
                               preferred_element_type=jnp.float32)         # (V_pad, B_blk)

    @pl.when(t == pl.num_programs(1) - 1)
    def _finalize():
        cnt = (ends - starts).astype(jnp.float32)                          # (1, B_blk)
        inv_cnt = jnp.where(cnt > 0.0, 1.0 / cnt, 0.0)                     # empty bag -> 0

        # Counts are small non-negative integers (<= bag length <= 256) -> exact in bf16.
        sums_t = jnp.dot(embT_ref[...], counts_ref[...].astype(jnp.bfloat16),
                         preferred_element_type=jnp.float32)               # (D_pad, B_blk)
        bag_emb_t = sums_t * inv_cnt                                       # EmbeddingBag(mean)

        logits_t = jnp.dot(w_ref[...], bag_emb_t.astype(jnp.bfloat16),
                           preferred_element_type=jnp.float32) + b_ref[...]  # (C_pad, B_blk)

        # Softmax over classes (sublane axis 0); padded class rows carry bias=-1e30 -> 0.
        m = jnp.max(logits_t, axis=0, keepdims=True)
        e = jnp.exp(logits_t - m)
        denom = jnp.sum(e, axis=0, keepdims=True)
        out_ref[...] = e / denom        # exact normalization: rows sum to 1


def _round_up(x, m):
    return (x + m - 1) // m * m


def _pick_tile_t(T, requested, V_pad):
    """Token-chunk length: lane-major text => multiple of 128 (lane width);
    256/512 by default keeps full MXU K tiles on v5e/v6e/v7x."""
    t_cap = _round_up(max(T, 1), 128)
    if requested is not None:
        return min(max(128, _round_up(int(requested), 128)), t_cap)
    tile = min(512, t_cap)
    # Keep the implicit (V_pad, tile) int32-iota + bf16 one-hot temporaries small
    # enough to leave headroom on v7x (64 MiB VMEM per TensorCore).
    budget = 12 * 1024 * 1024
    cap = max(128, (budget // max(1, 6 * V_pad)) // 128 * 128)
    return max(128, min(tile, cap))


def _vmem_limit_bytes(V_pad, D_pad, C_pad, b_block, tile):
    """Explicit scoped-VMEM budget (defaults: 16 MiB on v5e, 32 MiB on v6e/v7x)."""
    def phys(rows, cols, nbytes):          # footprint after (8, 128) tile padding
        return _round_up(rows, 8) * _round_up(cols, 128) * nbytes
    resident = (phys(D_pad, V_pad, 2)      # emb^T (bf16, single-buffered)
                + phys(C_pad, D_pad, 2)    # fc.weight (bf16)
                + phys(C_pad, 1, 4))       # fc.bias (f32)
    streamed = 2 * (phys(1, tile, 4)                   # token chunk (double-buffered)
                    + 2 * phys(1, b_block, 4))         # bag starts / ends
    fixed = (phys(V_pad, b_block, 4)                   # counts accumulator scratch
             + 2 * phys(C_pad, b_block, 4))            # output block
    temps = (phys(V_pad, tile, 4) + phys(V_pad, tile, 2)        # vocab iota + one-hot
             + phys(tile, b_block, 4) + phys(tile, b_block, 2)) # pos iota + bag one-hot
    total = resident + streamed + fixed + temps
    # 2x headroom, never below the 32 MiB default, capped at v7x's 64 MiB/TC.
    return int(min(64 * 1024 * 1024, max(32 * 1024 * 1024, 2 * total)))


def text_sentiment(text, offsets, emb, fc_w, fc_b, *, tile_t=None, b_block=128):
    """text: (T,) int32 token ids; offsets: (B,) int32 bag start offsets (sorted)."""
    T = int(text.shape[0])
    B = int(offsets.shape[0])
    V, D = int(emb.shape[0]), int(emb.shape[1])
    C = int(fc_w.shape[0])

    V_pad = _round_up(V, 128)
    D_pad = _round_up(D, 128)
    C_pad = _round_up(C, 8)
    b_block = max(128, _round_up(int(b_block), 128))
    B_pad = _round_up(max(B, 1), b_block)
    tile = _pick_tile_t(T, tile_t, V_pad)
    T_pad = _round_up(max(T, 1), tile)
    n_b = B_pad // b_block
    n_t = T_pad // tile

    offsets = offsets.astype(jnp.int32)
    ends_real = jnp.concatenate([offsets[1:], jnp.array([T], dtype=jnp.int32)])
    starts_row = jnp.zeros((1, B_pad), jnp.int32).at[0, :B].set(offsets)
    ends_row = jnp.zeros((1, B_pad), jnp.int32).at[0, :B].set(ends_real)
    # Padded bag lanes: start == end == 0 -> empty -> zero output column, sliced off.
    text_row = jnp.full((1, T_pad), -1, jnp.int32).at[0, :T].set(text.astype(jnp.int32))
    # Padded token columns carry id -1 (matches no vocab row) and lie past every bag window.

    embT_p = jnp.zeros((D_pad, V_pad), jnp.bfloat16).at[:D, :V].set(
        emb.T.astype(jnp.bfloat16))                                  # emb^T: (D, V)
    w_p = jnp.zeros((C_pad, D_pad), jnp.bfloat16).at[:C, :D].set(
        fc_w.astype(jnp.bfloat16))                                   # native (C, D)
    bias_p = jnp.full((C_pad, 1), -1e30, jnp.float32).at[:C, 0].set(
        fc_b.astype(jnp.float32))

    vmem_limit = _vmem_limit_bytes(V_pad, D_pad, C_pad, b_block, tile)

    def build(single_buffer_resident):
        resident_kw = (dict(pipeline_mode=pl.Buffered(1))
                       if single_buffer_resident else {})
        in_specs = [
            pl.BlockSpec((1, b_block), lambda b, t: (0, b)),                  # bag starts
            pl.BlockSpec((1, b_block), lambda b, t: (0, b)),                  # bag ends
            pl.BlockSpec((1, tile), lambda b, t: (0, t)),                     # token ids
            pl.BlockSpec((D_pad, V_pad), lambda b, t: (0, 0), **resident_kw), # emb^T (resident)
            pl.BlockSpec((C_pad, D_pad), lambda b, t: (0, 0), **resident_kw), # fc.weight
            pl.BlockSpec((C_pad, 1), lambda b, t: (0, 0), **resident_kw),     # fc.bias
        ]
        return pl.pallas_call(
            text_sentiment_kernel,
            out_shape=jax.ShapeDtypeStruct((C_pad, B_pad), jnp.float32),
            grid=(n_b, n_t),
            in_specs=in_specs,
            out_specs=pl.BlockSpec((C_pad, b_block), lambda b, t: (0, b)),
            scratch_shapes=[pltpu.VMEM((V_pad, b_block), jnp.float32)],       # counts_T
            compiler_params=pltpu.CompilerParams(
                dimension_semantics=("parallel", "arbitrary"),
                vmem_limit_bytes=vmem_limit),
        )

    args = (starts_row, ends_row, text_row, embT_p, w_p, bias_p)
    try:
        out_t = build(True)(*args)       # single-buffered resident tables (Buffered(1))
    except Exception:                    # pragma: no cover - runtime without Buffered(1)
        out_t = build(False)(*args)      # fall back to default double-buffering

    return out_t[:C, :B].T               # (B, C) class probabilities


if __name__ == "__main__":
    vocab_size, embed_dim, num_class = 32, 16, 4

    key = jax.random.PRNGKey(0)
    k_emb, k_w, k_text = jax.random.split(key, 3)

    # Deterministic init matching init_weights(): uniform(-0.5, 0.5), bias = 0.
    initrange = 0.5
    emb = jax.random.uniform(k_emb, (vocab_size, embed_dim),
                             minval=-initrange, maxval=initrange, dtype=jnp.float32)
    fc_w = jax.random.uniform(k_w, (num_class, embed_dim),
                              minval=-initrange, maxval=initrange, dtype=jnp.float32)
    fc_b = jnp.zeros((num_class,), dtype=jnp.float32)

    # 6 bags, 200 tokens total -> with tile_t=128 the stream spans 2 chunks,
    # exercising the init / accumulate / finalize phases of the kernel.
    bag_lens = [40, 25, 33, 50, 37, 15]
    T = sum(bag_lens)
    B = len(bag_lens)
    starts_py = [0]
    for length in bag_lens[:-1]:
        starts_py.append(starts_py[-1] + length)
    ends_py = starts_py[1:] + [T]
    offsets = jnp.array(starts_py, dtype=jnp.int32)
    text = jax.random.randint(k_text, (T,), 0, vocab_size, dtype=jnp.int32)

    out = text_sentiment(text, offsets, emb, fc_w, fc_b, tile_t=128)
    out = jax.block_until_ready(out)

    # Pure-f32 JAX reference: EmbeddingBag(mean) -> Linear -> softmax.
    rows = [jnp.mean(emb[text[s:e]], axis=0) for s, e in zip(starts_py, ends_py)]
    ref = jax.nn.softmax(jnp.stack(rows) @ fc_w.T + fc_b, axis=1)

    assert out.shape == (B, num_class)
    assert bool(jnp.all(jnp.isfinite(out)))
    assert bool(jnp.all(jnp.abs(jnp.sum(out, axis=1) - 1.0) < 1e-3))   # exact normalization
    assert bool(jnp.all(jnp.abs(out - ref) < 5e-2))                    # bf16 operand tolerance
    print("KERNEL_OK")
</pallas_src>

<mosaic_0001>
module attributes {stable_mosaic.version = 11 : i64} {
  func.func @text_sentiment_kernel(%arg0: i32, %arg1: i32, %arg2: memref<1x128xi32, #tpu.memory_space<vmem>>, %arg3: memref<1x128xi32, #tpu.memory_space<vmem>>, %arg4: memref<1x128xi32, #tpu.memory_space<vmem>>, %arg5: memref<128x128xbf16, #tpu.memory_space<vmem>>, %arg6: memref<8x128xbf16, #tpu.memory_space<vmem>>, %arg7: memref<8x1xf32, #tpu.memory_space<vmem>>, %arg8: memref<8x128xf32, #tpu.memory_space<vmem>>, %arg9: memref<128x128xf32, #tpu.memory_space<vmem>>) attributes {dimension_semantics = [#tpu.dimension_semantics<parallel>, #tpu.dimension_semantics<arbitrary>], iteration_bounds = array<i64: 1, 2>, scalar_prefetch = 0 : i64, scratch_operands = 1 : i64, tpu.core_type = #tpu.core_type<tc>, window_params = [{transform_indices = @transform_0, window_bounds = array<i64: 1, 128>}, {transform_indices = @transform_1, window_bounds = array<i64: 1, 128>}, {transform_indices = @transform_2, window_bounds = array<i64: 1, 128>}, {pipeline_mode = #tpu.pipeline_mode<synchronous>, transform_indices = @transform_3, window_bounds = array<i64: 128, 128>}, {pipeline_mode = #tpu.pipeline_mode<synchronous>, transform_indices = @transform_4, window_bounds = array<i64: 8, 128>}, {pipeline_mode = #tpu.pipeline_mode<synchronous>, transform_indices = @transform_5, window_bounds = array<i64: 8, 1>}, {transform_indices = @transform_6, window_bounds = array<i64: 8, 128>}]} {
    %c0_i32 = arith.constant 0 : i32
    %0 = arith.cmpi eq, %arg1, %c0_i32 : i32
    %1 = arith.extui %0 : i1 to i32
    %c0_i32_0 = arith.constant 0 : i32
    %2 = arith.cmpi ne, %1, %c0_i32_0 : i32
    scf.if %2 {
      %cst_11 = arith.constant 0.000000e+00 : f32
      %31 = vector.broadcast %cst_11 : f32 to vector<128x128xf32>
      %c0_12 = arith.constant 0 : index
      %c0_13 = arith.constant 0 : index
      %32 = vector.load %arg9[%c0_12, %c0_13] : memref<128x128xf32, #tpu.memory_space<vmem>>, vector<128x128xf32>
      tpu.vector_store %arg9[%c0_12, %c0_13], %31 {strides = array<i32>} : memref<128x128xf32, #tpu.memory_space<vmem>>, vector<128x128xf32>,
    } else {
    }
    %c0 = arith.constant 0 : index
    %c0_1 = arith.constant 0 : index
    %3 = vector.load %arg2[%c0, %c0_1] : memref<1x128xi32, #tpu.memory_space<vmem>>, vector<1x128xi32>
    %c0_2 = arith.constant 0 : index
    %c0_3 = arith.constant 0 : index
    %4 = vector.load %arg3[%c0_2, %c0_3] : memref<1x128xi32, #tpu.memory_space<vmem>>, vector<1x128xi32>
    %c0_4 = arith.constant 0 : index
    %c0_5 = arith.constant 0 : index
    %5 = vector.load %arg4[%c0_4, %c0_5] : memref<1x128xi32, #tpu.memory_space<vmem>>, vector<1x128xi32>
    %6 = tpu.iota {dimensions = array<i32: 0>} : vector<128x128xi32>
    %c128_i32 = arith.constant 128 : i32
    %7 = arith.muli %arg1, %c128_i32 : i32
    %8 = vector.broadcast %7 : i32 to vector<128x128xi32>
    %9 = arith.addi %6, %8 : vector<128x128xi32>
    %10 = vector.broadcast %3 : vector<1x128xi32> to vector<128x128xi32>
    %11 = arith.cmpi sge, %9, %10 : vector<128x128xi32>
    %12 = vector.broadcast %4 : vector<1x128xi32> to vector<128x128xi32>
    %13 = arith.cmpi slt, %9, %12 : vector<128x128xi32>
    %14 = arith.andi %11, %13 : vector<128x128xi1>
    %15 = arith.extui %14 : vector<128x128xi1> to vector<128x128xi32>
    %16 = arith.sitofp %15 : vector<128x128xi32> to vector<128x128xf32>
    %17 = arith.truncf %16 : vector<128x128xf32> to vector<128x128xbf16>
    %18 = tpu.iota {dimensions = array<i32: 0>} : vector<128x128xi32>
    %19 = vector.broadcast %5 : vector<1x128xi32> to vector<128x128xi32>
    %20 = arith.cmpi eq, %18, %19 : vector<128x128xi32>
    %21 = arith.extui %20 : vector<128x128xi1> to vector<128x128xi32>
    %22 = arith.sitofp %21 : vector<128x128xi32> to vector<128x128xf32>
    %23 = arith.truncf %22 : vector<128x128xf32> to vector<128x128xbf16>
    %c0_6 = arith.constant 0 : index
    %c0_7 = arith.constant 0 : index
    %24 = vector.load %arg9[%c0_6, %c0_7] : memref<128x128xf32, #tpu.memory_space<vmem>>, vector<128x128xf32>
    %cst = arith.constant dense<0.000000e+00> : vector<128x128xf32>
    %25 = tpu.matmul %23, %17, %cst {dimension_numbers = #tpu.dot_dimension_numbers<[1], [0], [0], [1], [0, 0, 1, 1], [], []>} : vector<128x128xbf16>, vector<128x128xbf16>, vector<128x128xf32> -> vector<128x128xf32>
    %26 = arith.addf %24, %25 : vector<128x128xf32>
    %c0_8 = arith.constant 0 : index
    %c0_9 = arith.constant 0 : index
    %27 = vector.load %arg9[%c0_8, %c0_9] : memref<128x128xf32, #tpu.memory_space<vmem>>, vector<128x128xf32>
    tpu.vector_store %arg9[%c0_8, %c0_9], %26 {strides = array<i32>} : memref<128x128xf32, #tpu.memory_space<vmem>>, vector<128x128xf32>,
    %c1_i32 = arith.constant 1 : i32
    %28 = arith.cmpi eq, %arg1, %c1_i32 : i32
    %29 = arith.extui %28 : i1 to i32
    %c0_i32_10 = arith.constant 0 : i32
    %30 = arith.cmpi ne, %29, %c0_i32_10 : i32
    scf.if %30 {
      %31 = arith.subi %4, %3 : vector<1x128xi32>
      %32 = arith.sitofp %31 : vector<1x128xi32> to vector<1x128xf32>
      %cst_11 = arith.constant 0.000000e+00 : f32
      %33 = vector.broadcast %cst_11 : f32 to vector<1x128xf32>
      %34 = arith.cmpf ogt, %32, %33 : vector<1x128xf32>
      %cst_12 = arith.constant 1.000000e+00 : f32
      %35 = vector.broadcast %cst_12 : f32 to vector<1x128xf32>
      %36 = arith.divf %35, %32 : vector<1x128xf32>
      %cst_13 = arith.constant 0.000000e+00 : f32
      %37 = vector.broadcast %cst_13 : f32 to vector<1x128xf32>
      %38 = arith.select %34, %36, %37 : vector<1x128xi1>, vector<1x128xf32>
      %c0_14 = arith.constant 0 : index
      %c0_15 = arith.constant 0 : index
      %39 = vector.load %arg5[%c0_14, %c0_15] : memref<128x128xbf16, #tpu.memory_space<vmem>>, vector<128x128xbf16>
      %c0_16 = arith.constant 0 : index
      %c0_17 = arith.constant 0 : index
      %40 = vector.load %arg9[%c0_16, %c0_17] : memref<128x128xf32, #tpu.memory_space<vmem>>, vector<128x128xf32>
      %41 = arith.truncf %40 : vector<128x128xf32> to vector<128x128xbf16>
      %cst_18 = arith.constant dense<0.000000e+00> : vector<128x128xf32>
      %42 = tpu.matmul %39, %41, %cst_18 {dimension_numbers = #tpu.dot_dimension_numbers<[1], [0], [0], [1], [0, 0, 1, 1], [], []>} : vector<128x128xbf16>, vector<128x128xbf16>, vector<128x128xf32> -> vector<128x128xf32>
      %43 = vector.broadcast %38 : vector<1x128xf32> to vector<128x128xf32>
      %44 = arith.mulf %42, %43 : vector<128x128xf32>
      %c0_19 = arith.constant 0 : index
      %c0_20 = arith.constant 0 : index
      %45 = vector.load %arg6[%c0_19, %c0_20] : memref<8x128xbf16, #tpu.memory_space<vmem>>, vector<8x128xbf16>
      %46 = arith.truncf %44 : vector<128x128xf32> to vector<128x128xbf16>
      %cst_21 = arith.constant dense<0.000000e+00> : vector<8x128xf32>
      %47 = tpu.matmul %45, %46, %cst_21 {dimension_numbers = #tpu.dot_dimension_numbers<[1], [0], [0], [1], [0, 0, 1, 1], [], []>} : vector<8x128xbf16>, vector<128x128xbf16>, vector<8x128xf32> -> vector<8x128xf32>
      %c0_22 = arith.constant 0 : index
      %c0_23 = arith.constant 0 : index
      %48 = vector.load %arg7[%c0_22, %c0_23] : memref<8x1xf32, #tpu.memory_space<vmem>>, vector<8x1xf32>
      %49 = vector.broadcast %48 : vector<8x1xf32> to vector<8x128xf32>
      %50 = arith.addf %47, %49 : vector<8x128xf32>
      %cst_24 = arith.constant dense<0xFF800000> : vector<128xf32>
      %51 = vector.multi_reduction <maximumf>, %50, %cst_24 [0] : vector<8x128xf32> to vector<128xf32>
      %52 = vector.shape_cast %51 : vector<128xf32> to vector<1x128xf32>
      %53 = vector.broadcast %52 : vector<1x128xf32> to vector<8x128xf32>
      %54 = arith.subf %50, %53 : vector<8x128xf32>
      %55 = math.exp %54 : vector<8x128xf32>
      %cst_25 = arith.constant dense<0.000000e+00> : vector<128xf32>
      %56 = vector.multi_reduction <add>, %55, %cst_25 [0] : vector<8x128xf32> to vector<128xf32>
      %57 = vector.shape_cast %56 : vector<128xf32> to vector<1x128xf32>
      %58 = vector.broadcast %57 : vector<1x128xf32> to vector<8x128xf32>
      %59 = arith.divf %55, %58 : vector<8x128xf32>
      %c0_26 = arith.constant 0 : index
      %c0_27 = arith.constant 0 : index
      %60 = vector.load %arg8[%c0_26, %c0_27] : memref<8x128xf32, #tpu.memory_space<vmem>>, vector<8x128xf32>
      tpu.vector_store %arg8[%c0_26, %c0_27], %59 {strides = array<i32>} : memref<8x128xf32, #tpu.memory_space<vmem>>, vector<8x128xf32>,
    } else {
    }
    return
  }
  func.func @transform_0(%arg0: i32, %arg1: i32) -> (i32, i32) {
    %c0_i32 = arith.constant 0 : i32
    %c0_i32_0 = arith.constant 0 : i32
    return %c0_i32, %arg0 : i32, i32
  }
  func.func @transform_1(%arg0: i32, %arg1: i32) -> (i32, i32) {
    %c0_i32 = arith.constant 0 : i32
    %c0_i32_0 = arith.constant 0 : i32
    return %c0_i32, %arg0 : i32, i32
  }
  func.func @transform_2(%arg0: i32, %arg1: i32) -> (i32, i32) {
    %c0_i32 = arith.constant 0 : i32
    %c0_i32_0 = arith.constant 0 : i32
    return %c0_i32, %arg1 : i32, i32
  }
  func.func @transform_3(%arg0: i32, %arg1: i32) -> (i32, i32) {
    %c0_i32 = arith.constant 0 : i32
    %c0_i32_0 = arith.constant 0 : i32
    %c0_i32_1 = arith.constant 0 : i32
    return %c0_i32, %c0_i32_0 : i32, i32
  }
  func.func @transform_4(%arg0: i32, %arg1: i32) -> (i32, i32) {
    %c0_i32 = arith.constant 0 : i32
    %c0_i32_0 = arith.constant 0 : i32
    %c0_i32_1 = arith.constant 0 : i32
    return %c0_i32, %c0_i32_0 : i32, i32
  }
  func.func @transform_5(%arg0: i32, %arg1: i32) -> (i32, i32) {
    %c0_i32 = arith.constant 0 : i32
    %c0_i32_0 = arith.constant 0 : i32
    %c0_i32_1 = arith.constant 0 : i32
    return %c0_i32, %c0_i32_0 : i32, i32
  }
  func.func @transform_6(%arg0: i32, %arg1: i32) -> (i32, i32) {
    %c0_i32 = arith.constant 0 : i32
    %c0_i32_0 = arith.constant 0 : i32
    return %c0_i32, %arg0 : i32, i32
  }
}

module attributes {stable_mosaic.version = 11 : i64} {
  func.func @text_sentiment_kernel(%arg0: i32, %arg1: i32, %arg2: memref<1x128xi32, #tpu.memory_space<vmem>>, %arg3: memref<1x128xi32, #tpu.memory_space<vmem>>, %arg4: memref<1x128xi32, #tpu.memory_space<vmem>>, %arg5: memref<128x128xbf16, #tpu.memory_space<vmem>>, %arg6: memref<8x128xbf16, #tpu.memory_space<vmem>>, %arg7: memref<8x1xf32, #tpu.memory_space<vmem>>, %arg8: memref<8x128xf32, #tpu.memory_space<vmem>>, %arg9: memref<128x128xf32, #tpu.memory_space<vmem>>) attributes {dimension_semantics = [#tpu.dimension_semantics<parallel>, #tpu.dimension_semantics<arbitrary>], iteration_bounds = array<i64: 1, 2>, scalar_prefetch = 0 : i64, scratch_operands = 1 : i64, tpu.core_type = #tpu.core_type<tc>, window_params = [{transform_indices = @transform_0, window_bounds = array<i64: 1, 128>}, {transform_indices = @transform_1, window_bounds = array<i64: 1, 128>}, {transform_indices = @transform_2, window_bounds = array<i64: 1, 128>}, {pipeline_mode = #tpu.pipeline_mode<synchronous>, transform_indices = @transform_3, window_bounds = array<i64: 128, 128>}, {pipeline_mode = #tpu.pipeline_mode<synchronous>, transform_indices = @transform_4, window_bounds = array<i64: 8, 128>}, {pipeline_mode = #tpu.pipeline_mode<synchronous>, transform_indices = @transform_5, window_bounds = array<i64: 8, 1>}, {transform_indices = @transform_6, window_bounds = array<i64: 8, 128>}]} {
    %c0_i32 = arith.constant 0 : i32
    %0 = arith.cmpi eq, %arg1, %c0_i32 : i32
    %1 = arith.extui %0 : i1 to i32
    %c0_i32_0 = arith.constant 0 : i32
    %2 = arith.cmpi ne, %1, %c0_i32_0 : i32
    scf.if %2 {
      %cst_11 = arith.constant 0.000000e+00 : f32
      %31 = vector.broadcast %cst_11 : f32 to vector<128x128xf32>
      %c0_12 = arith.constant 0 : index
      %c0_13 = arith.constant 0 : index
      %32 = vector.load %arg9[%c0_12, %c0_13] : memref<128x128xf32, #tpu.memory_space<vmem>>, vector<128x128xf32>
      tpu.vector_store %arg9[%c0_12, %c0_13], %31 {strides = array<i32>} : memref<128x128xf32, #tpu.memory_space<vmem>>, vector<128x128xf32>,
    } else {
    }
    %c0 = arith.constant 0 : index
    %c0_1 = arith.constant 0 : index
    %3 = vector.load %arg2[%c0, %c0_1] : memref<1x128xi32, #tpu.memory_space<vmem>>, vector<1x128xi32>
    %c0_2 = arith.constant 0 : index
    %c0_3 = arith.constant 0 : index
    %4 = vector.load %arg3[%c0_2, %c0_3] : memref<1x128xi32, #tpu.memory_space<vmem>>, vector<1x128xi32>
    %c0_4 = arith.constant 0 : index
    %c0_5 = arith.constant 0 : index
    %5 = vector.load %arg4[%c0_4, %c0_5] : memref<1x128xi32, #tpu.memory_space<vmem>>, vector<1x128xi32>
    %6 = tpu.iota {dimensions = array<i32: 0>} : vector<128x128xi32>
    %c128_i32 = arith.constant 128 : i32
    %7 = arith.muli %arg1, %c128_i32 : i32
    %8 = vector.broadcast %7 : i32 to vector<128x128xi32>
    %9 = arith.addi %6, %8 : vector<128x128xi32>
    %10 = vector.broadcast %3 : vector<1x128xi32> to vector<128x128xi32>
    %11 = arith.cmpi sge, %9, %10 : vector<128x128xi32>
    %12 = vector.broadcast %4 : vector<1x128xi32> to vector<128x128xi32>
    %13 = arith.cmpi slt, %9, %12 : vector<128x128xi32>
    %14 = arith.andi %11, %13 : vector<128x128xi1>
    %15 = arith.extui %14 : vector<128x128xi1> to vector<128x128xi32>
    %16 = arith.sitofp %15 : vector<128x128xi32> to vector<128x128xf32>
    %17 = arith.truncf %16 : vector<128x128xf32> to vector<128x128xbf16>
    %18 = tpu.iota {dimensions = array<i32: 0>} : vector<128x128xi32>
    %19 = vector.broadcast %5 : vector<1x128xi32> to vector<128x128xi32>
    %20 = arith.cmpi eq, %18, %19 : vector<128x128xi32>
    %21 = arith.extui %20 : vector<128x128xi1> to vector<128x128xi32>
    %22 = arith.sitofp %21 : vector<128x128xi32> to vector<128x128xf32>
    %23 = arith.truncf %22 : vector<128x128xf32> to vector<128x128xbf16>
    %c0_6 = arith.constant 0 : index
    %c0_7 = arith.constant 0 : index
    %24 = vector.load %arg9[%c0_6, %c0_7] : memref<128x128xf32, #tpu.memory_space<vmem>>, vector<128x128xf32>
    %cst = arith.constant dense<0.000000e+00> : vector<128x128xf32>
    %25 = tpu.matmul %23, %17, %cst {dimension_numbers = #tpu.dot_dimension_numbers<[1], [0], [0], [1], [0, 0, 1, 1], [], []>} : vector<128x128xbf16>, vector<128x128xbf16>, vector<128x128xf32> -> vector<128x128xf32>
    %26 = arith.addf %24, %25 : vector<128x128xf32>
    %c0_8 = arith.constant 0 : index
    %c0_9 = arith.constant 0 : index
    %27 = vector.load %arg9[%c0_8, %c0_9] : memref<128x128xf32, #tpu.memory_space<vmem>>, vector<128x128xf32>
    tpu.vector_store %arg9[%c0_8, %c0_9], %26 {strides = array<i32>} : memref<128x128xf32, #tpu.memory_space<vmem>>, vector<128x128xf32>,
    %c1_i32 = arith.constant 1 : i32
    %28 = arith.cmpi eq, %arg1, %c1_i32 : i32
    %29 = arith.extui %28 : i1 to i32
    %c0_i32_10 = arith.constant 0 : i32
    %30 = arith.cmpi ne, %29, %c0_i32_10 : i32
    scf.if %30 {
      %31 = arith.subi %4, %3 : vector<1x128xi32>
      %32 = arith.sitofp %31 : vector<1x128xi32> to vector<1x128xf32>
      %cst_11 = arith.constant 0.000000e+00 : f32
      %33 = vector.broadcast %cst_11 : f32 to vector<1x128xf32>
      %34 = arith.cmpf ogt, %32, %33 : vector<1x128xf32>
      %cst_12 = arith.constant 1.000000e+00 : f32
      %35 = vector.broadcast %cst_12 : f32 to vector<1x128xf32>
      %36 = arith.divf %35, %32 : vector<1x128xf32>
      %cst_13 = arith.constant 0.000000e+00 : f32
      %37 = vector.broadcast %cst_13 : f32 to vector<1x128xf32>
      %38 = arith.select %34, %36, %37 : vector<1x128xi1>, vector<1x128xf32>
      %c0_14 = arith.constant 0 : index
      %c0_15 = arith.constant 0 : index
      %39 = vector.load %arg5[%c0_14, %c0_15] : memref<128x128xbf16, #tpu.memory_space<vmem>>, vector<128x128xbf16>
      %c0_16 = arith.constant 0 : index
      %c0_17 = arith.constant 0 : index
      %40 = vector.load %arg9[%c0_16, %c0_17] : memref<128x128xf32, #tpu.memory_space<vmem>>, vector<128x128xf32>
      %41 = arith.truncf %40 : vector<128x128xf32> to vector<128x128xbf16>
      %cst_18 = arith.constant dense<0.000000e+00> : vector<128x128xf32>
      %42 = tpu.matmul %39, %41, %cst_18 {dimension_numbers = #tpu.dot_dimension_numbers<[1], [0], [0], [1], [0, 0, 1, 1], [], []>} : vector<128x128xbf16>, vector<128x128xbf16>, vector<128x128xf32> -> vector<128x128xf32>
      %43 = vector.broadcast %38 : vector<1x128xf32> to vector<128x128xf32>
      %44 = arith.mulf %42, %43 : vector<128x128xf32>
      %c0_19 = arith.constant 0 : index
      %c0_20 = arith.constant 0 : index
      %45 = vector.load %arg6[%c0_19, %c0_20] : memref<8x128xbf16, #tpu.memory_space<vmem>>, vector<8x128xbf16>
      %46 = arith.truncf %44 : vector<128x128xf32> to vector<128x128xbf16>
      %cst_21 = arith.constant dense<0.000000e+00> : vector<8x128xf32>
      %47 = tpu.matmul %45, %46, %cst_21 {dimension_numbers = #tpu.dot_dimension_numbers<[1], [0], [0], [1], [0, 0, 1, 1], [], []>} : vector<8x128xbf16>, vector<128x128xbf16>, vector<8x128xf32> -> vector<8x128xf32>
      %c0_22 = arith.constant 0 : index
      %c0_23 = arith.constant 0 : index
      %48 = vector.load %arg7[%c0_22, %c0_23] : memref<8x1xf32, #tpu.memory_space<vmem>>, vector<8x1xf32>
      %49 = vector.broadcast %48 : vector<8x1xf32> to vector<8x128xf32>
      %50 = arith.addf %47, %49 : vector<8x128xf32>
      %cst_24 = arith.constant dense<0xFF800000> : vector<128xf32>
      %51 = vector.multi_reduction <maximumf>, %50, %cst_24 [0] : vector<8x128xf32> to vector<128xf32>
      %52 = vector.shape_cast %51 : vector<128xf32> to vector<1x128xf32>
      %53 = vector.broadcast %52 : vector<1x128xf32> to vector<8x128xf32>
      %54 = arith.subf %50, %53 : vector<8x128xf32>
      %55 = math.exp %54 : vector<8x128xf32>
      %cst_25 = arith.constant dense<0.000000e+00> : vector<128xf32>
      %56 = vector.multi_reduction <add>, %55, %cst_25 [0] : vector<8x128xf32> to vector<128xf32>
      %57 = vector.shape_cast %56 : vector<128xf32> to vector<1x128xf32>
      %58 = vector.broadcast %57 : vector<1x128xf32> to vector<8x128xf32>
      %59 = arith.divf %55, %58 : vector<8x128xf32>
      %c0_26 = arith.constant 0 : index
      %c0_27 = arith.constant 0 : index
      %60 = vector.load %arg8[%c0_26, %c0_27] : memref<8x128xf32, #tpu.memory_space<vmem>>, vector<8x128xf32>
      tpu.vector_store %arg8[%c0_26, %c0_27], %59 {strides = array<i32>} : memref<8x128xf32, #tpu.memory_space<vmem>>, vector<8x128xf32>,
    } else {
    }
    return
  }
  func.func @transform_0(%arg0: i32, %arg1: i32) -> (i32, i32) {
    %c0_i32 = arith.constant 0 : i32
    %c0_i32_0 = arith.constant 0 : i32
    return %c0_i32, %arg0 : i32, i32
  }
  func.func @transform_1(%arg0: i32, %arg1: i32) -> (i32, i32) {
    %c0_i32 = arith.constant 0 : i32
    %c0_i32_0 = arith.constant 0 : i32
    return %c0_i32, %arg0 : i32, i32
  }
  func.func @transform_2(%arg0: i32, %arg1: i32) -> (i32, i32) {
    %c0_i32 = arith.constant 0 : i32
    %c0_i32_0 = arith.constant 0 : i32
    return %c0_i32, %arg1 : i32, i32
  }
  func.func @transform_3(%arg0: i32, %arg1: i32) -> (i32, i32) {
    %c0_i32 = arith.constant 0 : i32
    %c0_i32_0 = arith.constant 0 : i32
    %c0_i32_1 = arith.constant 0 : i32
    return %c0_i32, %c0_i32_0 : i32, i32
  }
  func.func @transform_4(%arg0: i32, %arg1: i32) -> (i32, i32) {
    %c0_i32 = arith.constant 0 : i32
    %c0_i32_0 = arith.constant 0 : i32
    %c0_i32_1 = arith.constant 0 : i32
    return %c0_i32, %c0_i32_0 : i32, i32
  }
  func.func @transform_5(%arg0: i32, %arg1: i32) -> (i32, i32) {
    %c0_i32 = arith.constant 0 : i32
    %c0_i32_0 = arith.constant 0 : i32
    %c0_i32_1 = arith.constant 0 : i32
    return %c0_i32, %c0_i32_0 : i32, i32
  }
  func.func @transform_6(%arg0: i32, %arg1: i32) -> (i32, i32) {
    %c0_i32 = arith.constant 0 : i32
    %c0_i32_0 = arith.constant 0 : i32
    return %c0_i32, %arg0 : i32, i32
  }
}

</mosaic_0001>

<llo_original>
// kernel: tpu_custom_call.1
$region0: #{tpu_custom_call.1}
  #allocation0 [shape = 'u32[]', space=smem, size = 0x4, offset = 0x4, fixed_abs, tag = 'smem constant byte address 0x4 - core index']
  #allocation1 [shape = 'u32[144,128]{1,0:T(1,128)}', space=vmem, size = 0x12000, scoped, tag = 'internal scratch']
  #allocation2 [shape = 'f32[128,128]{1,0:T(8,128)}', space=vmem, size = 0x10000, scoped, tag = 'scratch operand']
  %s0 = inlined_call_operand.vmem [shape: s32[1,128], index: 0, kind: input, shape index: {}]
  %s1 = inlined_call_operand.vmem [shape: s32[1,128], index: 1, kind: input, shape index: {}]
  %s2 = inlined_call_operand.vmem [shape: s32[1,256], index: 2, kind: input, shape index: {}]
  %s3 = inlined_call_operand.hbm [shape: bf16[128,128], index: 3, kind: input, shape index: {}]
  %s4 = inlined_call_operand.vmem [shape: bf16[8,128], index: 4, kind: input, shape index: {}]
  %s5 = inlined_call_operand.vmem [shape: f32[8,1], index: 5, kind: input, shape index: {}]
  %s6 = inlined_call_operand.hbm [shape: f32[8,128], index: 6, kind: output, shape index: {}]
  %s7 = sld [smem:[#allocation0]]
  $region69: #{tpu_custom_call.1} parent=0
    _
  %s9 = ssub.s32 1, %s7
  %s10 = scalar_select 0, %s9, %s7
  $region1: #{tpu_custom_call.1} parent=0
    #allocation3 [shape = 'u8[32768]{0}', space=vmem, size = 0x8000, scoped, tag = 'input window, operand 3, single buffered']
    #allocation4 [shape = 's32[2]{0}', space=sflag, size = 0x8, scoped, tag = 'scoped memory for tpu_custom_call.1']
    #allocation5 [shape = 's32[2]{0}', space=sflag, size = 0x8, scoped, tag = 'scoped memory for tpu_custom_call.1']
    #allocation6 [shape = 'u8[4096]{0}', space=vmem, size = 0x1000, scoped, tag = 'output window, operand 0, single buffered']
    %11 = vsyncpa [#allocation4], 0
    %12 = vsyncpa [#allocation5], 0
    loop: start=0, step=1, limit=4
    $region2: #{tpu_custom_call.1} parent=1 // loop_pre_header
      _
    $region3: #{tpu_custom_call.1} parent=1 // loop_header
      %s14 = sphi 0, %s18
      %p15 = scmp.ge.s32.totalorder %s14, 4
      %s21 = sphi 0, %s33
      %s22 = sphi 0, %s29
      %s23 = sphi 0, %s21
      %s24 = sphi 0, %s22
      %s25 = sphi 0, %s23
      %s26 = sphi 0, %s24
      %s36 = sphi 0, %s38
      %s39 = sphi 0, %s36
      %s40 = sphi 0, %s39
      %s56 = sphi 0, %s40
      %s62 = sphi 0, %s64
      %s65 = sphi 0, %s62
      %s66 = sphi 0, %s65
      %s82 = sphi 0, %s66
      %s88 = sphi 0, %s90
      %s91 = sphi 0, %s88
      %s92 = sphi 0, %s91
      %s108 = sphi 0, %s92
      %s112 = sphi 0, %s112
      %s114 = sphi 0, %s112
      %s115 = sphi 0, %s114
      %s129 = sphi 0, %s115
      %s133 = sphi 0, %s133
      %s135 = sphi 0, %s133
      %s136 = sphi 0, %s135
      %s150 = sphi 0, %s136
      %s154 = sphi 0, %s154
      %s156 = sphi 0, %s154
      %s157 = sphi 0, %s156
      %s171 = sphi 0, %s157
      %s177 = sphi 0, %s179
      %s180 = sphi 0, %s177
      %s181 = sphi 0, %s180
      %s197 = sphi 0, %s181
    $region4: #{tpu_custom_call.1} parent=1 // loop_header_branch
      %17 = sbr.rel (%p15) target = $region8
    $region5: #{tpu_custom_call.1} parent=1 // loop_body
      %s19 = ssub.s32 %s14, 1
      %s20 = ssub.s32 %s14, 2
      %s27 = sadd.s32 1, %s22
      %p28 = scmp.ge.s32.totalorder %s27, 2
      %s29 = scalar_select %p28, 0, %s27
      %s30 = sadd.s32 1, %s21
      %s31 = scalar_select %p28, %s30, %s21
      %p32 = scmp.ge.s32.totalorder %s31, 1
      %s33 = scalar_select %p32, 0, %s31
      %s34 = ssub.s32 %s21, %s33
      %p35 = scmp.eq.s32.totalorder %s34, 0
      %s37 = sadd.s32 %s36, 1
      %s38 = scalar_select %p35, %s36, %s37
      %p41 = pneg %p35
      %p42 = scmp.eq.s32.totalorder %s14, 1
      %p43 = por %p41, %p42
      %p44 = scmp.ne.s32.totalorder %s36, %s39
      %p45 = scmp.eq.s32.totalorder %s14, 0
      %p46 = por %p44, %p45
      %p47 = scmp.ne.s32.totalorder %s36, %s39
      %p48 = scmp.eq.s32.totalorder %s19, 1
      %p49 = por %p47, %p48
      %p50 = scmp.ne.s32.totalorder %s39, %s40
      %p51 = scmp.eq.s32.totalorder %s19, 0
      %p52 = por %p50, %p51
      %p53 = scmp.ne.s32.totalorder %s39, %s40
      %p54 = scmp.eq.s32.totalorder %s20, 1
      %p55 = por %p53, %p54
      %p57 = scmp.ne.s32.totalorder %s40, %s56
      %p58 = scmp.eq.s32.totalorder %s20, 0
      %p59 = por %p57, %p58
      %s60 = ssub.s32 %s21, %s33
      %p61 = scmp.eq.s32.totalorder %s60, 0
      %s63 = sadd.s32 %s62, 1
      %s64 = scalar_select %p61, %s62, %s63
      %p67 = pneg %p61
      %p68 = scmp.eq.s32.totalorder %s14, 1
      %p69 = por %p67, %p68
      %p70 = scmp.ne.s32.totalorder %s62, %s65
      %p71 = scmp.eq.s32.totalorder %s14, 0
      %p72 = por %p70, %p71
      %p73 = scmp.ne.s32.totalorder %s62, %s65
      %p74 = scmp.eq.s32.totalorder %s19, 1
      %p75 = por %p73, %p74
      %p76 = scmp.ne.s32.totalorder %s65, %s66
      %p77 = scmp.eq.s32.totalorder %s19, 0
      %p78 = por %p76, %p77
      %p79 = scmp.ne.s32.totalorder %s65, %s66
      %p80 = scmp.eq.s32.totalorder %s20, 1
      %p81 = por %p79, %p80
      %p83 = scmp.ne.s32.totalorder %s66, %s82
      %p84 = scmp.eq.s32.totalorder %s20, 0
      %p85 = por %p83, %p84
      %s86 = ssub.s32 %s22, %s29
      %p87 = scmp.eq.s32.totalorder %s86, 0
      %s89 = sadd.s32 %s88, 1
      %s90 = scalar_select %p87, %s88, %s89
      %p93 = pneg %p87
      %p94 = scmp.eq.s32.totalorder %s14, 1
      %p95 = por %p93, %p94
      %p96 = scmp.ne.s32.totalorder %s88, %s91
      %p97 = scmp.eq.s32.totalorder %s14, 0
      %p98 = por %p96, %p97
      %p99 = scmp.ne.s32.totalorder %s88, %s91
      %p100 = scmp.eq.s32.totalorder %s19, 1
      %p101 = por %p99, %p100
      %p102 = scmp.ne.s32.totalorder %s91, %s92
      %p103 = scmp.eq.s32.totalorder %s19, 0
      %p104 = por %p102, %p103
      %p105 = scmp.ne.s32.totalorder %s91, %s92
      %p106 = scmp.eq.s32.totalorder %s20, 1
      %p107 = por %p105, %p106
      %p109 = scmp.ne.s32.totalorder %s92, %s108
      %p110 = scmp.eq.s32.totalorder %s20, 0
      %p111 = por %p109, %p110
      %s113 = sadd.s32 %s112, 1
      %p116 = scmp.eq.s32.totalorder %s14, 1
      %p117 = scmp.ne.s32.totalorder %s112, %s114
      %p118 = scmp.eq.s32.totalorder %s14, 0
      %p119 = por %p117, %p118
      %p120 = scmp.ne.s32.totalorder %s112, %s114
      %p121 = scmp.eq.s32.totalorder %s19, 1
      %p122 = por %p120, %p121
      %p123 = scmp.ne.s32.totalorder %s114, %s115
      %p124 = scmp.eq.s32.totalorder %s19, 0
      %p125 = por %p123, %p124
      %p126 = scmp.ne.s32.totalorder %s114, %s115
      %p127 = scmp.eq.s32.totalorder %s20, 1
      %p128 = por %p126, %p127
      %p130 = scmp.ne.s32.totalorder %s115, %s129
      %p131 = scmp.eq.s32.totalorder %s20, 0
      %p132 = por %p130, %p131
      %s134 = sadd.s32 %s133, 1
      %p137 = scmp.eq.s32.totalorder %s14, 1
      %p138 = scmp.ne.s32.totalorder %s133, %s135
      %p139 = scmp.eq.s32.totalorder %s14, 0
      %p140 = por %p138, %p139
      %p141 = scmp.ne.s32.totalorder %s133, %s135
      %p142 = scmp.eq.s32.totalorder %s19, 1
      %p143 = por %p141, %p142
      %p144 = scmp.ne.s32.totalorder %s135, %s136
      %p145 = scmp.eq.s32.totalorder %s19, 0
      %p146 = por %p144, %p145
      %p147 = scmp.ne.s32.totalorder %s135, %s136
      %p148 = scmp.eq.s32.totalorder %s20, 1
      %p149 = por %p147, %p148
      %p151 = scmp.ne.s32.totalorder %s136, %s150
      %p152 = scmp.eq.s32.totalorder %s20, 0
      %p153 = por %p151, %p152
      %s155 = sadd.s32 %s154, 1
      %p158 = scmp.eq.s32.totalorder %s14, 1
      %p159 = scmp.ne.s32.totalorder %s154, %s156
      %p160 = scmp.eq.s32.totalorder %s14, 0
      %p161 = por %p159, %p160
      %p162 = scmp.ne.s32.totalorder %s154, %s156
      %p163 = scmp.eq.s32.totalorder %s19, 1
      %p164 = por %p162, %p163
      %p165 = scmp.ne.s32.totalorder %s156, %s157
      %p166 = scmp.eq.s32.totalorder %s19, 0
      %p167 = por %p165, %p166
      %p168 = scmp.ne.s32.totalorder %s156, %s157
      %p169 = scmp.eq.s32.totalorder %s20, 1
      %p170 = por %p168, %p169
      %p172 = scmp.ne.s32.totalorder %s157, %s171
      %p173 = scmp.eq.s32.totalorder %s20, 0
      %p174 = por %p172, %p173
      %s175 = ssub.s32 %s21, %s33
      %p176 = scmp.eq.s32.totalorder %s175, 0
      %s178 = sadd.s32 %s177, 1
      %s179 = scalar_select %p176, %s177, %s178
      %p182 = pneg %p176
      %p183 = scmp.eq.s32.totalorder %s14, 1
      %p184 = por %p182, %p183
      %p185 = scmp.ne.s32.totalorder %s177, %s180
      %p186 = scmp.eq.s32.totalorder %s14, 0
      %p187 = por %p185, %p186
      %p188 = scmp.ne.s32.totalorder %s177, %s180
      %p189 = scmp.eq.s32.totalorder %s19, 1
      %p190 = por %p188, %p189
      %p191 = scmp.ne.s32.totalorder %s180, %s181
      %p192 = scmp.eq.s32.totalorder %s19, 0
      %p193 = por %p191, %p192
      %p194 = scmp.ne.s32.totalorder %s180, %s181
      %p195 = scmp.eq.s32.totalorder %s20, 1
      %p196 = por %p194, %p195
      %p198 = scmp.ne.s32.totalorder %s181, %s197
      %p199 = scmp.eq.s32.totalorder %s20, 0
      %p200 = por %p198, %p199
      %p201 = scmp.le.s32.totalorder 1, %s14
      %p202 = scmp.lt.s32.totalorder %s14, 3
      %p203 = pnand %p201, %p202
      %p204 = pneg %p203
      // Predicated region
      $region9: #{tpu_custom_call.1} parent=5 // pred_check
        _
      $region10: #{tpu_custom_call.1} parent=5 // pred_check_branch
        %206 = sbr.rel (%p203) target = $region12
      $region11: #{tpu_custom_call.1} parent=5 // pred_region
        %s207 = ssub.s32 %s14, 1
        // Predicated region
        $region13: #{tpu_custom_call.1} parent=11 // pred_check
          %p208 = pneg %p52
        $region14: #{tpu_custom_call.1} parent=11 // pred_check_branch
          %210 = sbr.rel (%p208) target = $region16
        $region15: #{tpu_custom_call.1} parent=11 // pred_region
          %p211 = scmp.lt.s32.totalorder %s23, 0
          %s212 = scalar_select %p211, %s23, 0
          %s213 = scalar_lea.vmem %s0, %s212
        $region16: #{tpu_custom_call.1} parent=11 // pred_fallthru
          _
        // Predicated region
        $region17: #{tpu_custom_call.1} parent=11 // pred_check
          %p214 = pneg %p78
        $region18: #{tpu_custom_call.1} parent=11 // pred_check_branch
          %216 = sbr.rel (%p214) target = $region20
        $region19: #{tpu_custom_call.1} parent=11 // pred_region
          %p217 = scmp.lt.s32.totalorder %s23, 0
          %s218 = scalar_select %p217, %s23, 0
          %s219 = scalar_lea.vmem %s1, %s218
        $region20: #{tpu_custom_call.1} parent=11 // pred_fallthru
          _
        // Predicated region
        $region21: #{tpu_custom_call.1} parent=11 // pred_check
          %p220 = pneg %p125
        $region22: #{tpu_custom_call.1} parent=11 // pred_check_branch
          %222 = sbr.rel (%p220) target = $region24
        $region23: #{tpu_custom_call.1} parent=11 // pred_region
          %s224 = ssub.s32 1024, 1024
          %225 = vsyncadd [#allocation4], %s224
          %s226 = sshll.u32 [#allocation3], 4
          %s227 = int_to_ptr.vmem [resolvable:$true] %s226
          %232 = dma.hbm_to_vmem [thread:$0]  %s3, 1024, %s227, [#allocation4], 64, 64, 4
        $region24: #{tpu_custom_call.1} parent=11 // pred_fallthru
          _
        // Predicated region
        $region25: #{tpu_custom_call.1} parent=11 // pred_check
          %p233 = pneg %p146
        $region26: #{tpu_custom_call.1} parent=11 // pred_check_branch
          %235 = sbr.rel (%p233) target = $region28
        $region27: #{tpu_custom_call.1} parent=11 // pred_region
          _
        $region28: #{tpu_custom_call.1} parent=11 // pred_fallthru
          _
        // Predicated region
        $region29: #{tpu_custom_call.1} parent=11 // pred_check
          %p236 = pneg %p167
        $region30: #{tpu_custom_call.1} parent=11 // pred_check_branch
          %238 = sbr.rel (%p236) target = $region32
        $region31: #{tpu_custom_call.1} parent=11 // pred_region
          _
        $region32: #{tpu_custom_call.1} parent=11 // pred_fallthru
          _
      $region12: #{tpu_custom_call.1} parent=5 // pred_fallthru
        _
      %p239 = scmp.lt.s32.totalorder %s14, 2
      // Predicated region
      $region33: #{tpu_custom_call.1} parent=5 // pred_check
        %p240 = pneg %p239
      $region34: #{tpu_custom_call.1} parent=5 // pred_check_branch
        %242 = sbr.rel (%p240) target = $region36
      $region35: #{tpu_custom_call.1} parent=5 // pred_region
        // Predicated region
        $region37: #{tpu_custom_call.1} parent=35 // pred_check
          %p243 = pneg %p98
        $region38: #{tpu_custom_call.1} parent=35 // pred_check_branch
          %245 = sbr.rel (%p243) target = $region40
        $region39: #{tpu_custom_call.1} parent=35 // pred_region
          %p246 = scmp.lt.s32.totalorder %s22, 1
          %s247 = scalar_select %p246, %s22, 1
          %s248 = scalar_lea.vmem %s2, %s247
        $region40: #{tpu_custom_call.1} parent=35 // pred_fallthru
          _
      $region36: #{tpu_custom_call.1} parent=5 // pred_fallthru
        _
      %p249 = scmp.le.s32.totalorder 1, %s14
      %p250 = scmp.lt.s32.totalorder %s14, 3
      %p251 = pnand %p249, %p250
      %p252 = pneg %p251
      // Predicated region
      $region41: #{tpu_custom_call.1} parent=5 // pred_check
        _
      $region42: #{tpu_custom_call.1} parent=5 // pred_check_branch
        %254 = sbr.rel (%p251) target = $region44
      $region43: #{tpu_custom_call.1} parent=5 // pred_region
        %s255 = ssub.s32 %s14, 1
        // Predicated region
        $region45: #{tpu_custom_call.1} parent=43 // pred_check
          %p256 = pneg %p125
        $region46: #{tpu_custom_call.1} parent=43 // pred_check_branch
          %258 = sbr.rel (%p256) target = $region48
        $region47: #{tpu_custom_call.1} parent=43 // pred_region
          %259 = dma.done [#allocation4], 1024
        $region48: #{tpu_custom_call.1} parent=43 // pred_fallthru
          _
        %p260 = scmp.lt.s32.totalorder %s23, 0
        %s261 = scalar_select %p260, %s23, 0
        %s262 = scalar_lea.vmem %s0, %s261
        %p263 = pneg %p52
        %p264 = pneg %p49
        %p265 = scmp.lt.s32.totalorder %s23, 0
        %s266 = scalar_select %p265, %s23, 0
        %s267 = scalar_lea.vmem %s1, %s266
        %p268 = pneg %p78
        %p269 = pneg %p75
        %p270 = scmp.lt.s32.totalorder %s24, 1
        %s271 = scalar_select %p270, %s24, 1
        %s272 = scalar_lea.vmem %s2, %s271
        %p273 = pneg %p104
        %p274 = pneg %p101
        %p275 = pneg %p125
        %p276 = pneg %p122
        %p277 = pneg %p146
        %p278 = pneg %p143
        %p279 = pneg %p167
        %p280 = pneg %p164
        %p281 = pneg %p193
        %p282 = pneg %p190
        %p283 = scmp.lt.s32.totalorder %s23, 0
        %s284 = scalar_select %p283, %s23, 0
        %s285 = scalar_lea.vmem %s0, %s284
        %p286 = scmp.lt.s32.totalorder %s23, 0
        %s287 = scalar_select %p286, %s23, 0
        %s288 = scalar_lea.vmem %s1, %s287
        %p289 = scmp.lt.s32.totalorder %s24, 1
        %s290 = scalar_select %p289, %s24, 1
        %s291 = scalar_lea.vmem %s2, %s290
        %p293 = scmp.eq.s32.totalorder %s24, 0
        // Predicated region
        $region49: #{tpu_custom_call.1} parent=43 // pred_check
          %p294 = pneg %p293
        $region50: #{tpu_custom_call.1} parent=43 // pred_check_branch
          %296 = sbr.rel (%p294) target = $region52
        $region51: #{tpu_custom_call.1} parent=43 // pred_region
          %297 = vst [vmem:[#allocation2] sm:$0xff] 0.0
          %298 = vst [vmem:[#allocation2 + $0x8] sm:$0xff] 0.0
          %299 = vst [vmem:[#allocation2 + $0x10] sm:$0xff] 0.0
          %300 = vst [vmem:[#allocation2 + $0x18] sm:$0xff] 0.0
          %301 = vst [vmem:[#allocation2 + $0x20] sm:$0xff] 0.0
          %302 = vst [vmem:[#allocation2 + $0x28] sm:$0xff] 0.0
          %303 = vst [vmem:[#allocation2 + $0x30] sm:$0xff] 0.0
          %304 = vst [vmem:[#allocation2 + $0x38] sm:$0xff] 0.0
          %305 = vst [vmem:[#allocation2 + $0x40] sm:$0xff] 0.0
          %306 = vst [vmem:[#allocation2 + $0x48] sm:$0xff] 0.0
          %307 = vst [vmem:[#allocation2 + $0x50] sm:$0xff] 0.0
          %308 = vst [vmem:[#allocation2 + $0x58] sm:$0xff] 0.0
          %309 = vst [vmem:[#allocation2 + $0x60] sm:$0xff] 0.0
          %310 = vst [vmem:[#allocation2 + $0x68] sm:$0xff] 0.0
          %311 = vst [vmem:[#allocation2 + $0x70] sm:$0xff] 0.0
          %312 = vst [vmem:[#allocation2 + $0x78] sm:$0xff] 0.0
        $region52: #{tpu_custom_call.1} parent=43 // pred_fallthru
          _
        %v313 = vld [vmem:[%s285] sm:$0x1]
        %v314 = vld [vmem:[%s288] sm:$0x1]
        %v315 = vld [vmem:[%s291] sm:$0x1]
        %v316 = vlaneseq
        %v317 = vshrl.u32 %v316, 7
        %v318 = vadd.s32 %v317, 8
        %v319 = vadd.s32 %v317, 16
        %v320 = vadd.s32 %v317, 24
        %v321 = vadd.s32 %v317, 32
        %v322 = vadd.s32 %v317, 40
        %v323 = vadd.s32 %v317, 48
        %v324 = vadd.s32 %v317, 56
        %v325 = vadd.s32 %v317, 64
        %v326 = vadd.s32 %v317, 72
        %v327 = vadd.s32 %v317, 80
        %v328 = vadd.s32 %v317, 88
        %v329 = vadd.s32 %v317, 96
        %v330 = vadd.s32 %v317, 104
        %v331 = vadd.s32 %v317, 112
        %v332 = vadd.s32 %v317, 120
        %s333 = smul.u32 %s24, 128
        %v334 = vstv %s333
        %v335 = vadd.s32 %v317, %v334
        %v336 = vadd.s32 %v318, %v334
        %v337 = vadd.s32 %v319, %v334
        %v338 = vadd.s32 %v320, %v334
        %v339 = vadd.s32 %v321, %v334
        %v340 = vadd.s32 %v322, %v334
        %v341 = vadd.s32 %v323, %v334
        %v342 = vadd.s32 %v324, %v334
        %v343 = vadd.s32 %v325, %v334
        %v344 = vadd.s32 %v326, %v334
        %v345 = vadd.s32 %v327, %v334
        %v346 = vadd.s32 %v328, %v334
        %v347 = vadd.s32 %v329, %v334
        %v348 = vadd.s32 %v330, %v334
        %v349 = vadd.s32 %v331, %v334
        %v350 = vadd.s32 %v332, %v334
        %v351 = vlaneseq
        %v352 = vshrl.u32 %v351, 7
        %v353 = vsub.s32 0, %v352
        %v354 = vrot.slane %v313, %v353
        %vm355 = vcmp.ge.s32.totalorder %v335, %v354
        %vm356 = vcmp.ge.s32.totalorder %v336, %v354
        %vm357 = vcmp.ge.s32.totalorder %v337, %v354
        %vm358 = vcmp.ge.s32.totalorder %v338, %v354
        %vm359 = vcmp.ge.s32.totalorder %v339, %v354
        %vm360 = vcmp.ge.s32.totalorder %v340, %v354
        %vm361 = vcmp.ge.s32.totalorder %v341, %v354
        %vm362 = vcmp.ge.s32.totalorder %v342, %v354
        %vm363 = vcmp.ge.s32.totalorder %v343, %v354
        %vm364 = vcmp.ge.s32.totalorder %v344, %v354
        %vm365 = vcmp.ge.s32.totalorder %v345, %v354
        %vm366 = vcmp.ge.s32.totalorder %v346, %v354
        %vm367 = vcmp.ge.s32.totalorder %v347, %v354
        %vm368 = vcmp.ge.s32.totalorder %v348, %v354
        %vm369 = vcmp.ge.s32.totalorder %v349, %v354
        %vm370 = vcmp.ge.s32.totalorder %v350, %v354
        %v371 = vlaneseq
        %v372 = vshrl.u32 %v371, 7
        %v373 = vsub.s32 0, %v372
        %v374 = vrot.slane %v314, %v373
        %vm375 = vcmp.lt.s32.totalorder %v335, %v374
        %vm376 = vcmp.lt.s32.totalorder %v336, %v374
        %vm377 = vcmp.lt.s32.totalorder %v337, %v374
        %vm378 = vcmp.lt.s32.totalorder %v338, %v374
        %vm379 = vcmp.lt.s32.totalorder %v339, %v374
        %vm380 = vcmp.lt.s32.totalorder %v340, %v374
        %vm381 = vcmp.lt.s32.totalorder %v341, %v374
        %vm382 = vcmp.lt.s32.totalorder %v342, %v374
        %vm383 = vcmp.lt.s32.totalorder %v343, %v374
        %vm384 = vcmp.lt.s32.totalorder %v344, %v374
        %vm385 = vcmp.lt.s32.totalorder %v345, %v374
        %vm386 = vcmp.lt.s32.totalorder %v346, %v374
        %vm387 = vcmp.lt.s32.totalorder %v347, %v374
        %vm388 = vcmp.lt.s32.totalorder %v348, %v374
        %vm389 = vcmp.lt.s32.totalorder %v349, %v374
        %vm390 = vcmp.lt.s32.totalorder %v350, %v374
        %vm391 = vmand %vm355, %vm375
        %vm392 = vmand %vm356, %vm376
        %vm393 = vmand %vm357, %vm377
        %vm394 = vmand %vm358, %vm378
        %vm395 = vmand %vm359, %vm379
        %vm396 = vmand %vm360, %vm380
        %vm397 = vmand %vm361, %vm381
        %vm398 = vmand %vm362, %vm382
        %vm399 = vmand %vm363, %vm383
        %vm400 = vmand %vm364, %vm384
        %vm401 = vmand %vm365, %vm385
        %vm402 = vmand %vm366, %vm386
        %vm403 = vmand %vm367, %vm387
        %vm404 = vmand %vm368, %vm388
        %vm405 = vmand %vm369, %vm389
        %vm406 = vmand %vm370, %vm390
        %v407 = vsel %vm391, 1, 0
        %v408 = vsel %vm392, 1, 0
        %v409 = vsel %vm393, 1, 0
        %v410 = vsel %vm394, 1, 0
        %v411 = vsel %vm395, 1, 0
        %v412 = vsel %vm396, 1, 0
        %v413 = vsel %vm397, 1, 0
        %v414 = vsel %vm398, 1, 0
        %v415 = vsel %vm399, 1, 0
        %v416 = vsel %vm400, 1, 0
        %v417 = vsel %vm401, 1, 0
        %v418 = vsel %vm402, 1, 0
        %v419 = vsel %vm403, 1, 0
        %v420 = vsel %vm404, 1, 0
        %v421 = vsel %vm405, 1, 0
        %v422 = vsel %vm406, 1, 0
        %v423 = vcvt.s32.f32 %v407
        %v424 = vcvt.s32.f32 %v408
        %v425 = vcvt.s32.f32 %v409
        %v426 = vcvt.s32.f32 %v410
        %v427 = vcvt.s32.f32 %v411
        %v428 = vcvt.s32.f32 %v412
        %v429 = vcvt.s32.f32 %v413
        %v430 = vcvt.s32.f32 %v414
        %v431 = vcvt.s32.f32 %v415
        %v432 = vcvt.s32.f32 %v416
        %v433 = vcvt.s32.f32 %v417
        %v434 = vcvt.s32.f32 %v418
        %v435 = vcvt.s32.f32 %v419
        %v436 = vcvt.s32.f32 %v420
        %v437 = vcvt.s32.f32 %v421
        %v438 = vcvt.s32.f32 %v422
        %v439 = vpack.c.bf16 %v424, %v423
        %v440 = vpack.c.bf16 %v426, %v425
        %v441 = vpack.c.bf16 %v428, %v427
        %v442 = vpack.c.bf16 %v430, %v429
        %v443 = vpack.c.bf16 %v432, %v431
        %v444 = vpack.c.bf16 %v434, %v433
        %v445 = vpack.c.bf16 %v436, %v435
        %v446 = vpack.c.bf16 %v438, %v437
        %v447 = vlaneseq
        %v448 = vshrl.u32 %v447, 7
        %v449 = vsub.s32 0, %v448
        %v450 = vrot.slane %v315, %v449
        %vm451 = vcmp.eq.s32.totalorder %v317, %v450
        %vm452 = vcmp.eq.s32.totalorder %v318, %v450
        %vm453 = vcmp.eq.s32.totalorder %v319, %v450
        %vm454 = vcmp.eq.s32.totalorder %v320, %v450
        %vm455 = vcmp.eq.s32.totalorder %v321, %v450
        %vm456 = vcmp.eq.s32.totalorder %v322, %v450
        %vm457 = vcmp.eq.s32.totalorder %v323, %v450
        %vm458 = vcmp.eq.s32.totalorder %v324, %v450
        %vm459 = vcmp.eq.s32.totalorder %v325, %v450
        %vm460 = vcmp.eq.s32.totalorder %v326, %v450
        %vm461 = vcmp.eq.s32.totalorder %v327, %v450
        %vm462 = vcmp.eq.s32.totalorder %v328, %v450
        %vm463 = vcmp.eq.s32.totalorder %v329, %v450
        %vm464 = vcmp.eq.s32.totalorder %v330, %v450
        %vm465 = vcmp.eq.s32.totalorder %v331, %v450
        %vm466 = vcmp.eq.s32.totalorder %v332, %v450
        %v467 = vsel %vm451, 1, 0
        %v468 = vsel %vm452, 1, 0
        %v469 = vsel %vm453, 1, 0
        %v470 = vsel %vm454, 1, 0
        %v471 = vsel %vm455, 1, 0
        %v472 = vsel %vm456, 1, 0
        %v473 = vsel %vm457, 1, 0
        %v474 = vsel %vm458, 1, 0
        %v475 = vsel %vm459, 1, 0
        %v476 = vsel %vm460, 1, 0
        %v477 = vsel %vm461, 1, 0
        %v478 = vsel %vm462, 1, 0
        %v479 = vsel %vm463, 1, 0
        %v480 = vsel %vm464, 1, 0
        %v481 = vsel %vm465, 1, 0
        %v482 = vsel %vm466, 1, 0
        %v483 = vcvt.s32.f32 %v467
        %v484 = vcvt.s32.f32 %v468
        %v485 = vcvt.s32.f32 %v469
        %v486 = vcvt.s32.f32 %v470
        %v487 = vcvt.s32.f32 %v471
        %v488 = vcvt.s32.f32 %v472
        %v489 = vcvt.s32.f32 %v473
        %v490 = vcvt.s32.f32 %v474
        %v491 = vcvt.s32.f32 %v475
        %v492 = vcvt.s32.f32 %v476
        %v493 = vcvt.s32.f32 %v477
        %v494 = vcvt.s32.f32 %v478
        %v495 = vcvt.s32.f32 %v479
        %v496 = vcvt.s32.f32 %v480
        %v497 = vcvt.s32.f32 %v481
        %v498 = vcvt.s32.f32 %v482
        %v499 = vpack.c.bf16 %v484, %v483
        %v500 = vpack.c.bf16 %v486, %v485
        %v501 = vpack.c.bf16 %v488, %v487
        %v502 = vpack.c.bf16 %v490, %v489
        %v503 = vpack.c.bf16 %v492, %v491
        %v504 = vpack.c.bf16 %v494, %v493
        %v505 = vpack.c.bf16 %v496, %v495
        %v506 = vpack.c.bf16 %v498, %v497
        %v507 = vld [vmem:[#allocation2] sm:$0xff]
        %v508 = vld [vmem:[#allocation2 + $0x8] sm:$0xff]
        %v509 = vld [vmem:[#allocation2 + $0x10] sm:$0xff]
        %v510 = vld [vmem:[#allocation2 + $0x18] sm:$0xff]
        %v511 = vld [vmem:[#allocation2 + $0x20] sm:$0xff]
        %v512 = vld [vmem:[#allocation2 + $0x28] sm:$0xff]
        %v513 = vld [vmem:[#allocation2 + $0x30] sm:$0xff]
        %v514 = vld [vmem:[#allocation2 + $0x38] sm:$0xff]
        %v515 = vld [vmem:[#allocation2 + $0x40] sm:$0xff]
        %v516 = vld [vmem:[#allocation2 + $0x48] sm:$0xff]
        %v517 = vld [vmem:[#allocation2 + $0x50] sm:$0xff]
        %v518 = vld [vmem:[#allocation2 + $0x58] sm:$0xff]
        %v519 = vld [vmem:[#allocation2 + $0x60] sm:$0xff]
        %v520 = vld [vmem:[#allocation2 + $0x68] sm:$0xff]
        %v521 = vld [vmem:[#allocation2 + $0x70] sm:$0xff]
        %v522 = vld [vmem:[#allocation2 + $0x78] sm:$0xff]
        %523 = vmatprep.subr.bf16.mxu0 0
        %524 = vmatpush1.bf16.msra.mxu0 %v439
        %525 = vmatprep.subr.bf16.mxu0 0
        %526 = vmatpush1.bf16.msra.mxu0 %v440
        %527 = vmatprep.subr.bf16.mxu0 0
        %528 = vmatpush1.bf16.msra.mxu0 %v441
        %529 = vmatprep.subr.bf16.mxu0 0
        %530 = vmatpush1.bf16.msra.mxu0 %v442
        %531 = vmatprep.subr.bf16.mxu0 0
        %532 = vmatpush1.bf16.msra.mxu0 %v443
        %533 = vmatprep.subr.bf16.mxu0 0
        %534 = vmatpush1.bf16.msra.mxu0 %v444
        %535 = vmatprep.subr.bf16.mxu0 0
        %536 = vmatpush1.bf16.msra.mxu0 %v445
        %537 = vmatprep.subr.bf16.mxu0 0
        %538 = vmatpush1.bf16.msra.mxu0 %v446
        %539 = vmatprep.subr.bf16.mxu0 0
        %540 = vmatpush1.bf16.msra.mxu0 0
        %541 = vmatprep.subr.bf16.mxu0 0
        %542 = vmatpush1.bf16.msra.mxu0 0
        %543 = vmatprep.subr.bf16.mxu0 0
        %544 = vmatpush1.bf16.msra.mxu0 0
        %545 = vmatprep.subr.bf16.mxu0 0
        %546 = vmatpush1.bf16.msra.mxu0 0
        %547 = vmatprep.subr.bf16.mxu0 0
        %548 = vmatpush1.bf16.msra.mxu0 0
        %549 = vmatprep.subr.bf16.mxu0 0
        %550 = vmatpush1.bf16.msra.mxu0 0
        %551 = vmatprep.subr.bf16.mxu0 0
        %552 = vmatpush1.bf16.msra.mxu0 0
        %553 = vmatprep.subr.bf16.mxu0 0
        %554 = vmatpush1.bf16.msra.mxu0 0
        %555 = vmatprep.mubr.bf16.mxu0 0
        %556 = vmatmul.mubr.bf16.gmra.mrb[0].mxu0 %v499
        %v557 = vpop.f32.mrb[0].mxu0
        %v558 = vadd.f32 0.0, %v557
        %v559 = vpop.f32.mrb[0].mxu0
        %v560 = vpop.f32.mrb[0].mxu0
        %v561 = vadd.f32 0.0, %v560
        %v562 = vpop.f32.mrb[0].mxu0
        %563 = vmatprep.mubr.bf16.mxu0 0
        %564 = vmatmul.mubr.bf16.gmra.mrb[0].mxu0 %v500
        %v565 = vpop.f32.mrb[0].mxu0
        %v566 = vadd.f32 0.0, %v565
        %v567 = vpop.f32.mrb[0].mxu0
        %v568 = vpop.f32.mrb[0].mxu0
        %v569 = vadd.f32 0.0, %v568
        %v570 = vpop.f32.mrb[0].mxu0
        %571 = vmatprep.mubr.bf16.mxu0 0
        %572 = vmatmul.mubr.bf16.gmra.mrb[0].mxu0 %v501
        %v573 = vpop.f32.mrb[0].mxu0
        %v574 = vadd.f32 0.0, %v573
        %v575 = vpop.f32.mrb[0].mxu0
        %v576 = vpop.f32.mrb[0].mxu0
        %v577 = vadd.f32 0.0, %v576
        %v578 = vpop.f32.mrb[0].mxu0
        %579 = vmatprep.mubr.bf16.mxu0 0
        %580 = vmatmul.mubr.bf16.gmra.mrb[0].mxu0 %v502
        %v581 = vpop.f32.mrb[0].mxu0
        %v582 = vadd.f32 0.0, %v581
        %v583 = vpop.f32.mrb[0].mxu0
        %v584 = vpop.f32.mrb[0].mxu0
        %v585 = vadd.f32 0.0, %v584
        %v586 = vpop.f32.mrb[0].mxu0
        %587 = vmatprep.mubr.bf16.mxu0 0
        %588 = vmatmul.mubr.bf16.gmra.mrb[0].mxu0 %v503
        %v589 = vpop.f32.mrb[0].mxu0
        %v590 = vadd.f32 0.0, %v589
        %v591 = vpop.f32.mrb[0].mxu0
        %v592 = vpop.f32.mrb[0].mxu0
        %v593 = vadd.f32 0.0, %v592
        %v594 = vpop.f32.mrb[0].mxu0
        %595 = vmatprep.mubr.bf16.mxu0 0
        %596 = vmatmul.mubr.bf16.gmra.mrb[0].mxu0 %v504
        %v597 = vpop.f32.mrb[0].mxu0
        %v598 = vadd.f32 0.0, %v597
        %v599 = vpop.f32.mrb[0].mxu0
        %v600 = vpop.f32.mrb[0].mxu0
        %v601 = vadd.f32 0.0, %v600
        %v602 = vpop.f32.mrb[0].mxu0
        %603 = vmatprep.mubr.bf16.mxu0 0
        %604 = vmatmul.mubr.bf16.gmra.mrb[0].mxu0 %v505
        %v605 = vpop.f32.mrb[0].mxu0
        %v606 = vadd.f32 0.0, %v605
        %v607 = vpop.f32.mrb[0].mxu0
        %v608 = vpop.f32.mrb[0].mxu0
        %v609 = vadd.f32 0.0, %v608
        %v610 = vpop.f32.mrb[0].mxu0
        %611 = vmatprep.mubr.bf16.mxu0 0
        %612 = vmatmul.mubr.bf16.gmra.mrb[0].mxu0 %v506
        %v613 = vpop.f32.mrb[0].mxu0
        %v614 = vadd.f32 0.0, %v613
        %v615 = vpop.f32.mrb[0].mxu0
        %v616 = vpop.f32.mrb[0].mxu0
        %v617 = vadd.f32 0.0, %v616
        %v618 = vpop.f32.mrb[0].mxu0
        %619 = vdwg.mxu0
        %v620 = vadd.f32 %v507, %v558
        %v621 = vadd.f32 %v508, %v561
        %v622 = vadd.f32 %v509, %v566
        %v623 = vadd.f32 %v510, %v569
        %v624 = vadd.f32 %v511, %v574
        %v625 = vadd.f32 %v512, %v577
        %v626 = vadd.f32 %v513, %v582
        %v627 = vadd.f32 %v514, %v585
        %v628 = vadd.f32 %v515, %v590
        %v629 = vadd.f32 %v516, %v593
        %v630 = vadd.f32 %v517, %v598
        %v631 = vadd.f32 %v518, %v601
        %v632 = vadd.f32 %v519, %v606
        %v633 = vadd.f32 %v520, %v609
        %v634 = vadd.f32 %v521, %v614
        %v635 = vadd.f32 %v522, %v617
        %636 = vst [vmem:[#allocation2] sm:$0xff] %v620
        %637 = vst [vmem:[#allocation2 + $0x8] sm:$0xff] %v621
        %638 = vst [vmem:[#allocation2 + $0x10] sm:$0xff] %v622
        %639 = vst [vmem:[#allocation2 + $0x18] sm:$0xff] %v623
        %640 = vst [vmem:[#allocation2 + $0x20] sm:$0xff] %v624
        %641 = vst [vmem:[#allocation2 + $0x28] sm:$0xff] %v625
        %642 = vst [vmem:[#allocation2 + $0x30] sm:$0xff] %v626
        %643 = vst [vmem:[#allocation2 + $0x38] sm:$0xff] %v627
        %644 = vst [vmem:[#allocation2 + $0x40] sm:$0xff] %v628
        %645 = vst [vmem:[#allocation2 + $0x48] sm:$0xff] %v629
        %646 = vst [vmem:[#allocation2 + $0x50] sm:$0xff] %v630
        %647 = vst [vmem:[#allocation2 + $0x58] sm:$0xff] %v631
        %648 = vst [vmem:[#allocation2 + $0x60] sm:$0xff] %v632
        %649 = vst [vmem:[#allocation2 + $0x68] sm:$0xff] %v633
        %650 = vst [vmem:[#allocation2 + $0x70] sm:$0xff] %v634
        %651 = vst [vmem:[#allocation2 + $0x78] sm:$0xff] %v635
        %p652 = scmp.eq.s32.totalorder %s24, 1
        // Predicated region
        $region53: #{tpu_custom_call.1} parent=43 // pred_check
          %p653 = pneg %p652
        $region54: #{tpu_custom_call.1} parent=43 // pred_check_branch
          %655 = sbr.rel (%p653) target = $region56
        $region55: #{tpu_custom_call.1} parent=43 // pred_region
          %v656 = vsub.s32 %v314, %v313
          %v657 = vcvt.s32.f32 %v656
          %vm658 = vcmp.gt.f32.partialorder %v657, 0.0
          %v659 = vrcp.pop %v657
          %v660 = vmul.f32 1.0, %v659
          %v661 = vsel %vm658, %v660, 0.0
          %v662 = vld [vmem:[#allocation3] sm:$0xf]
          %v663 = vld [vmem:[#allocation3 + $0x4] sm:$0xf]
          %v664 = vld [vmem:[#allocation3 + $0x8] sm:$0xf]
          %v665 = vld [vmem:[#allocation3 + $0xc] sm:$0xf]
          %v666 = vld [vmem:[#allocation3 + $0x10] sm:$0xf]
          %v667 = vld [vmem:[#allocation3 + $0x14] sm:$0xf]
          %v668 = vld [vmem:[#allocation3 + $0x18] sm:$0xf]
          %v669 = vld [vmem:[#allocation3 + $0x1c] sm:$0xf]
          %v670 = vld [vmem:[#allocation3 + $0x20] sm:$0xf]
          %v671 = vld [vmem:[#allocation3 + $0x24] sm:$0xf]
          %v672 = vld [vmem:[#allocation3 + $0x28] sm:$0xf]
          %v673 = vld [vmem:[#allocation3 + $0x2c] sm:$0xf]
          %v674 = vld [vmem:[#allocation3 + $0x30] sm:$0xf]
          %v675 = vld [vmem:[#allocation3 + $0x34] sm:$0xf]
          %v676 = vld [vmem:[#allocation3 + $0x38] sm:$0xf]
          %v677 = vld [vmem:[#allocation3 + $0x3c] sm:$0xf]
          %v678 = vld [vmem:[#allocation2] sm:$0xff]
          %v679 = vld [vmem:[#allocation2 + $0x8] sm:$0xff]
          %v680 = vld [vmem:[#allocation2 + $0x10] sm:$0xff]
          %v681 = vld [vmem:[#allocation2 + $0x18] sm:$0xff]
          %v682 = vld [vmem:[#allocation2 + $0x20] sm:$0xff]
          %v683 = vld [vmem:[#allocation2 + $0x28] sm:$0xff]
          %v684 = vld [vmem:[#allocation2 + $0x30] sm:$0xff]
          %v685 = vld [vmem:[#allocation2 + $0x38] sm:$0xff]
          %v686 = vld [vmem:[#allocation2 + $0x40] sm:$0xff]
          %v687 = vld [vmem:[#allocation2 + $0x48] sm:$0xff]
          %v688 = vld [vmem:[#allocation2 + $0x50] sm:$0xff]
          %v689 = vld [vmem:[#allocation2 + $0x58] sm:$0xff]
          %v690 = vld [vmem:[#allocation2 + $0x60] sm:$0xff]
          %v691 = vld [vmem:[#allocation2 + $0x68] sm:$0xff]
          %v692 = vld [vmem:[#allocation2 + $0x70] sm:$0xff]
          %v693 = vld [vmem:[#allocation2 + $0x78] sm:$0xff]
          %v694 = vpack.c.bf16 %v679, %v678
          %v695 = vpack.c.bf16 %v681, %v680
          %v696 = vpack.c.bf16 %v683, %v682
          %v697 = vpack.c.bf16 %v685, %v684
          %v698 = vpack.c.bf16 %v687, %v686
          %v699 = vpack.c.bf16 %v689, %v688
          %v700 = vpack.c.bf16 %v691, %v690
          %v701 = vpack.c.bf16 %v693, %v692
          %v718 = vunpack.c.l.b16 %v662
          %v719 = vunpack.c.l.b16 %v663
          %v720 = vunpack.c.l.b16 %v664
          %v721 = vunpack.c.l.b16 %v665
          %v722 = vunpack.c.l.b16 %v666
          %v723 = vunpack.c.l.b16 %v667
          %v724 = vunpack.c.l.b16 %v668
          %v725 = vunpack.c.l.b16 %v669
          %v726 = vunpack.c.l.b16 %v670
          %v727 = vunpack.c.l.b16 %v671
          %v728 = vunpack.c.l.b16 %v672
          %v729 = vunpack.c.l.b16 %v673
          %v730 = vunpack.c.l.b16 %v674
          %v731 = vunpack.c.l.b16 %v675
          %v732 = vunpack.c.l.b16 %v676
          %v733 = vunpack.c.l.b16 %v677
          %v734 = vpack.c.b16 %v719, %v718
          %v735 = vpack.c.b16 %v721, %v720
          %v736 = vpack.c.b16 %v723, %v722
          %v737 = vpack.c.b16 %v725, %v724
          %v738 = vpack.c.b16 %v727, %v726
          %v739 = vpack.c.b16 %v729, %v728
          %v740 = vpack.c.b16 %v731, %v730
          %v741 = vpack.c.b16 %v733, %v732
          %750 = vmatprep.subr.bf16.mxu0 0
          %751 = vmatpush1.bf16.msra.mxu0 %v694
          %752 = vmatprep.subr.bf16.mxu0 0
          %753 = vmatpush1.bf16.msra.mxu0 %v695
          %754 = vmatprep.subr.bf16.mxu0 0
          %755 = vmatpush1.bf16.msra.mxu0 %v696
          %756 = vmatprep.subr.bf16.mxu0 0
          %757 = vmatpush1.bf16.msra.mxu0 %v697
          %758 = vmatprep.subr.bf16.mxu0 0
          %759 = vmatpush1.bf16.msra.mxu0 %v698
          %760 = vmatprep.subr.bf16.mxu0 0
          %761 = vmatpush1.bf16.msra.mxu0 %v699
          %762 = vmatprep.subr.bf16.mxu0 0
          %763 = vmatpush1.bf16.msra.mxu0 %v700
          %764 = vmatprep.subr.bf16.mxu0 0
          %765 = vmatpush1.bf16.msra.mxu0 %v701
          %766 = vmatprep.subr.bf16.mxu0 0
          %767 = vmatpush1.bf16.msra.mxu0 0
          %768 = vmatprep.subr.bf16.mxu0 0
          %769 = vmatpush1.bf16.msra.mxu0 0
          %770 = vmatprep.subr.bf16.mxu0 0
          %771 = vmatpush1.bf16.msra.mxu0 0
          %772 = vmatprep.subr.bf16.mxu0 0
          %773 = vmatpush1.bf16.msra.mxu0 0
          %774 = vmatprep.subr.bf16.mxu0 0
          %775 = vmatpush1.bf16.msra.mxu0 0
          %776 = vmatprep.subr.bf16.mxu0 0
          %777 = vmatpush1.bf16.msra.mxu0 0
          %778 = vmatprep.subr.bf16.mxu0 0
          %779 = vmatpush1.bf16.msra.mxu0 0
          %780 = vmatprep.subr.bf16.mxu0 0
          %781 = vmatpush1.bf16.msra.mxu0 0
          %782 = vmatprep.mubr.bf16.mxu0 0
          %783 = vmatmul.mubr.bf16.gmra.mrb[0].mxu0 %v734
          %v784 = vpop.f32.mrb[0].mxu0
          %v785 = vadd.f32 0.0, %v784
          %v786 = vpop.f32.mrb[0].mxu0
          %v787 = vpop.f32.mrb[0].mxu0
          %v788 = vadd.f32 0.0, %v787
          %v789 = vpop.f32.mrb[0].mxu0
          %790 = vmatprep.mubr.bf16.mxu0 0
          %791 = vmatmul.mubr.bf16.gmra.mrb[0].mxu0 %v735
          %v792 = vpop.f32.mrb[0].mxu0
          %v793 = vadd.f32 0.0, %v792
          %v794 = vpop.f32.mrb[0].mxu0
          %v795 = vpop.f32.mrb[0].mxu0
          %v796 = vadd.f32 0.0, %v795
          %v797 = vpop.f32.mrb[0].mxu0
          %798 = vmatprep.mubr.bf16.mxu0 0
          %799 = vmatmul.mubr.bf16.gmra.mrb[0].mxu0 %v736
          %v800 = vpop.f32.mrb[0].mxu0
          %v801 = vadd.f32 0.0, %v800
          %v802 = vpop.f32.mrb[0].mxu0
          %v803 = vpop.f32.mrb[0].mxu0
          %v804 = vadd.f32 0.0, %v803
          %v805 = vpop.f32.mrb[0].mxu0
          %806 = vmatprep.mubr.bf16.mxu0 0
          %807 = vmatmul.mubr.bf16.gmra.mrb[0].mxu0 %v737
          %v808 = vpop.f32.mrb[0].mxu0
          %v809 = vadd.f32 0.0, %v808
          %v810 = vpop.f32.mrb[0].mxu0
          %v811 = vpop.f32.mrb[0].mxu0
          %v812 = vadd.f32 0.0, %v811
          %v813 = vpop.f32.mrb[0].mxu0
          %814 = vmatprep.mubr.bf16.mxu0 0
          %815 = vmatmul.mubr.bf16.gmra.mrb[0].mxu0 %v738
          %v816 = vpop.f32.mrb[0].mxu0
          %v817 = vadd.f32 0.0, %v816
          %v818 = vpop.f32.mrb[0].mxu0
          %v819 = vpop.f32.mrb[0].mxu0
          %v820 = vadd.f32 0.0, %v819
          %v821 = vpop.f32.mrb[0].mxu0
          %822 = vmatprep.mubr.bf16.mxu0 0
          %823 = vmatmul.mubr.bf16.gmra.mrb[0].mxu0 %v739
          %v824 = vpop.f32.mrb[0].mxu0
          %v825 = vadd.f32 0.0, %v824
          %v826 = vpop.f32.mrb[0].mxu0
          %v827 = vpop.f32.mrb[0].mxu0
          %v828 = vadd.f32 0.0, %v827
          %v829 = vpop.f32.mrb[0].mxu0
          %830 = vmatprep.mubr.bf16.mxu0 0
          %831 = vmatmul.mubr.bf16.gmra.mrb[0].mxu0 %v740
          %v832 = vpop.f32.mrb[0].mxu0
          %v833 = vadd.f32 0.0, %v832
          %v834 = vpop.f32.mrb[0].mxu0
          %v835 = vpop.f32.mrb[0].mxu0
          %v836 = vadd.f32 0.0, %v835
          %v837 = vpop.f32.mrb[0].mxu0
          %838 = vmatprep.mubr.bf16.mxu0 0
          %839 = vmatmul.mubr.bf16.gmra.mrb[0].mxu0 %v741
          %v840 = vpop.f32.mrb[0].mxu0
          %v841 = vadd.f32 0.0, %v840
          %v842 = vpop.f32.mrb[0].mxu0
          %v843 = vpop.f32.mrb[0].mxu0
          %v844 = vadd.f32 0.0, %v843
          %v845 = vpop.f32.mrb[0].mxu0
          %846 = vdwg.mxu0
          %v848 = vlaneseq
          %v849 = vshrl.u32 %v848, 7
          %v850 = vsub.s32 0, %v849
          %v851 = vrot.slane %v661, %v850
          %v853 = vmul.f32 %v785, %v851
          %v854 = vmul.f32 %v788, %v851
          %v855 = vmul.f32 %v793, %v851
          %v856 = vmul.f32 %v796, %v851
          %v857 = vmul.f32 %v801, %v851
          %v858 = vmul.f32 %v804, %v851
          %v859 = vmul.f32 %v809, %v851
          %v860 = vmul.f32 %v812, %v851
          %v861 = vmul.f32 %v817, %v851
          %v862 = vmul.f32 %v820, %v851
          %v863 = vmul.f32 %v825, %v851
          %v864 = vmul.f32 %v828, %v851
          %v865 = vmul.f32 %v833, %v851
          %v866 = vmul.f32 %v836, %v851
          %v867 = vmul.f32 %v841, %v851
          %v868 = vmul.f32 %v844, %v851
          %v869 = vld [vmem:[%s4] sm:$0xf]
          %v870 = vpack.c.bf16 %v854, %v853
          %v871 = vpack.c.bf16 %v856, %v855
          %v872 = vpack.c.bf16 %v858, %v857
          %v873 = vpack.c.bf16 %v860, %v859
          %v874 = vpack.c.bf16 %v862, %v861
          %v875 = vpack.c.bf16 %v864, %v863
          %v876 = vpack.c.bf16 %v866, %v865
          %v877 = vpack.c.bf16 %v868, %v867
          %v878 = vld [vmem:[%s5] sm:$0xff]
          %880 = vset.pattern.permute.xlu0 0
          %881 = vperm.xlu0 %880, %v878
          %v882 = vpop.permute.xlu0 %881
          %884 = vmatprep.subr.bf16.mxu0 0
          %885 = vmatpush1.bf16.msra.mxu0 %v870
          %886 = vmatprep.subr.bf16.mxu0 0
          %887 = vmatpush1.bf16.msra.mxu0 %v871
          %888 = vmatprep.subr.bf16.mxu0 0
          %889 = vmatpush1.bf16.msra.mxu0 %v872
          %890 = vmatprep.subr.bf16.mxu0 0
          %891 = vmatpush1.bf16.msra.mxu0 %v873
          %892 = vmatprep.subr.bf16.mxu0 0
          %893 = vmatpush1.bf16.msra.mxu0 %v874
          %894 = vmatprep.subr.bf16.mxu0 0
          %895 = vmatpush1.bf16.msra.mxu0 %v875
          %896 = vmatprep.subr.bf16.mxu0 0
          %897 = vmatpush1.bf16.msra.mxu0 %v876
          %898 = vmatprep.subr.bf16.mxu0 0
          %899 = vmatpush1.bf16.msra.mxu0 %v877
          %900 = vmatprep.subr.bf16.mxu0 0
          %901 = vmatpush1.bf16.msra.mxu0 0
          %902 = vmatprep.subr.bf16.mxu0 0
          %903 = vmatpush1.bf16.msra.mxu0 0
          %904 = vmatprep.subr.bf16.mxu0 0
          %905 = vmatpush1.bf16.msra.mxu0 0
          %906 = vmatprep.subr.bf16.mxu0 0
          %907 = vmatpush1.bf16.msra.mxu0 0
          %908 = vmatprep.subr.bf16.mxu0 0
          %909 = vmatpush1.bf16.msra.mxu0 0
          %910 = vmatprep.subr.bf16.mxu0 0
          %911 = vmatpush1.bf16.msra.mxu0 0
          %912 = vmatprep.subr.bf16.mxu0 0
          %913 = vmatpush1.bf16.msra.mxu0 0
          %914 = vmatprep.subr.bf16.mxu0 0
          %915 = vmatpush1.bf16.msra.mxu0 0
          %916 = vmatprep.mubr.bf16.mxu0 0
          %917 = vmatmul.mubr.bf16.gmra.mrb[0].mxu0 %v869
          %v918 = vpop.f32.mrb[0].mxu0
          %v919 = vadd.f32 %v882, %v918
          %v920 = vpop.f32.mrb[0].mxu0
          %v921 = vpop.f32.mrb[0].mxu0
          %v922 = vpop.f32.mrb[0].mxu0
          %923 = vdwg.mxu0
          %v924 = vrot.slane %v919, 4
          %v925 = vmax.f32 %v919, %v924
          %v926 = vrot.slane %v925, 2
          %v927 = vmax.f32 %v925, %v926
          %v928 = vrot.slane %v927, 1
          %v929 = vmax.f32 %v927, %v928
          %v930 = vsub.f32 %v919, %v929
          %v931 = vmul.f32 %v930, 1.442695
          %v932 = vpow.pop %v931
          %v933 = vrot.slane %v932, 4
          %v934 = vadd.f32 %v932, %v933
          %v935 = vrot.slane %v934, 2
          %v936 = vadd.f32 %v934, %v935
          %v937 = vrot.slane %v936, 1
          %v938 = vadd.f32 %v936, %v937
          %v939 = vrcp.pop %v938
          %v940 = vmul.f32 %v932, %v939
          %941 = vst [vmem:[#allocation6] sm:$0xff] %v940
        $region56: #{tpu_custom_call.1} parent=43 // pred_fallthru
          _
        // Predicated region
        $region57: #{tpu_custom_call.1} parent=43 // pred_check
          %p942 = pneg %p190
        $region58: #{tpu_custom_call.1} parent=43 // pred_check_branch
          %944 = sbr.rel (%p942) target = $region60
        $region59: #{tpu_custom_call.1} parent=43 // pred_region
          %s946 = ssub.s32 128, 128
          %947 = vsyncadd [#allocation5], %s946
          %s948 = smul.addr %s23, 128
          %s949 = scalar_lea.hbm %s6, %s948
          %s951 = sshll.u32 [#allocation6], 4
          %s952 = int_to_ptr.vmem [resolvable:$true] %s951
          %954 = dma.vmem_to_hbm [thread:$0]  %s952, 128, %s949, [#allocation5]
        $region60: #{tpu_custom_call.1} parent=43 // pred_fallthru
          _
        // Predicated region
        $region61: #{tpu_custom_call.1} parent=43 // pred_check
          %p955 = pneg %p190
        $region62: #{tpu_custom_call.1} parent=43 // pred_check_branch
          %957 = sbr.rel (%p955) target = $region64
        $region63: #{tpu_custom_call.1} parent=43 // pred_region
          %958 = dma.done [#allocation5], 128
        $region64: #{tpu_custom_call.1} parent=43 // pred_fallthru
          _
      $region44: #{tpu_custom_call.1} parent=5 // pred_fallthru
        _
      %p959 = scmp.le.s32.totalorder 2, %s14
      // Predicated region
      $region65: #{tpu_custom_call.1} parent=5 // pred_check
        %p960 = pneg %p959
      $region66: #{tpu_custom_call.1} parent=5 // pred_check_branch
        %962 = sbr.rel (%p960) target = $region68
      $region67: #{tpu_custom_call.1} parent=5 // pred_region
        %s963 = ssub.s32 %s14, 2
      $region68: #{tpu_custom_call.1} parent=5 // pred_fallthru
        _
    $region6: #{tpu_custom_call.1} parent=1 // loop_footer
      %s18 = sadd.s32 1, %s14
    $region7: #{tpu_custom_call.1} parent=1 // loop_footer_branch
      %13 = sbr.rel target = $region3
    $region8: #{tpu_custom_call.1} parent=1 // loop_exit
      _
    %964 = vsyncpa [#allocation4], 1
    %s965 = scalar_lea.sflag [#allocation4], 1
    %966 = vsyncpa %s965, 1
    %967 = vsyncpa [#allocation5], 1
    %s968 = scalar_lea.sflag [#allocation5], 1
    %969 = vsyncpa %s968, 1

// kernel: tpu_custom_call.1
$region0: #{tpu_custom_call.1}
  #allocation0 [shape = 'u32[]', space=smem, size = 0x4, offset = 0x4, fixed_abs, tag = 'smem constant byte address 0x4 - core index']
  #allocation1 [shape = 'u32[144,128]{1,0:T(1,128)}', space=vmem, size = 0x12000, scoped, tag = 'internal scratch']
  #allocation2 [shape = 'f32[128,128]{1,0:T(8,128)}', space=vmem, size = 0x10000, scoped, tag = 'scratch operand']
  %s0 = inlined_call_operand.vmem [shape: s32[1,128], index: 0, kind: input, shape index: {}]
  %s1 = inlined_call_operand.vmem [shape: s32[1,128], index: 1, kind: input, shape index: {}]
  %s2 = inlined_call_operand.vmem [shape: s32[1,256], index: 2, kind: input, shape index: {}]
  %s3 = inlined_call_operand.hbm [shape: bf16[128,128], index: 3, kind: input, shape index: {}]
  %s4 = inlined_call_operand.vmem [shape: bf16[8,128], index: 4, kind: input, shape index: {}]
  %s5 = inlined_call_operand.vmem [shape: f32[8,1], index: 5, kind: input, shape index: {}]
  %s6 = inlined_call_operand.hbm [shape: f32[8,128], index: 6, kind: output, shape index: {}]
  %s7 = sld [smem:[#allocation0]]
  $region69: #{tpu_custom_call.1} parent=0
    _
  %s9 = ssub.s32 1, %s7
  %s10 = scalar_select 0, %s9, %s7
  $region1: #{tpu_custom_call.1} parent=0
    #allocation3 [shape = 'u8[32768]{0}', space=vmem, size = 0x8000, scoped, tag = 'input window, operand 3, single buffered']
    #allocation4 [shape = 's32[2]{0}', space=sflag, size = 0x8, scoped, tag = 'scoped memory for tpu_custom_call.1']
    #allocation5 [shape = 's32[2]{0}', space=sflag, size = 0x8, scoped, tag = 'scoped memory for tpu_custom_call.1']
    #allocation6 [shape = 'u8[4096]{0}', space=vmem, size = 0x1000, scoped, tag = 'output window, operand 0, single buffered']
    %11 = vsyncpa [#allocation4], 0
    %12 = vsyncpa [#allocation5], 0
    loop: start=0, step=1, limit=4
    $region2: #{tpu_custom_call.1} parent=1 // loop_pre_header
      _
    $region3: #{tpu_custom_call.1} parent=1 // loop_header
      %s14 = sphi 0, %s18
      %p15 = scmp.ge.s32.totalorder %s14, 4
      %s21 = sphi 0, %s33
      %s22 = sphi 0, %s29
      %s23 = sphi 0, %s21
      %s24 = sphi 0, %s22
      %s25 = sphi 0, %s23
      %s26 = sphi 0, %s24
      %s36 = sphi 0, %s38
      %s39 = sphi 0, %s36
      %s40 = sphi 0, %s39
      %s56 = sphi 0, %s40
      %s62 = sphi 0, %s64
      %s65 = sphi 0, %s62
      %s66 = sphi 0, %s65
      %s82 = sphi 0, %s66
      %s88 = sphi 0, %s90
      %s91 = sphi 0, %s88
      %s92 = sphi 0, %s91
      %s108 = sphi 0, %s92
      %s112 = sphi 0, %s112
      %s114 = sphi 0, %s112
      %s115 = sphi 0, %s114
      %s129 = sphi 0, %s115
      %s133 = sphi 0, %s133
      %s135 = sphi 0, %s133
      %s136 = sphi 0, %s135
      %s150 = sphi 0, %s136
      %s154 = sphi 0, %s154
      %s156 = sphi 0, %s154
      %s157 = sphi 0, %s156
      %s171 = sphi 0, %s157
      %s177 = sphi 0, %s179
      %s180 = sphi 0, %s177
      %s181 = sphi 0, %s180
      %s197 = sphi 0, %s181
    $region4: #{tpu_custom_call.1} parent=1 // loop_header_branch
      %17 = sbr.rel (%p15) target = $region8
    $region5: #{tpu_custom_call.1} parent=1 // loop_body
      %s19 = ssub.s32 %s14, 1
      %s20 = ssub.s32 %s14, 2
      %s27 = sadd.s32 1, %s22
      %p28 = scmp.ge.s32.totalorder %s27, 2
      %s29 = scalar_select %p28, 0, %s27
      %s30 = sadd.s32 1, %s21
      %s31 = scalar_select %p28, %s30, %s21
      %p32 = scmp.ge.s32.totalorder %s31, 1
      %s33 = scalar_select %p32, 0, %s31
      %s34 = ssub.s32 %s21, %s33
      %p35 = scmp.eq.s32.totalorder %s34, 0
      %s37 = sadd.s32 %s36, 1
      %s38 = scalar_select %p35, %s36, %s37
      %p41 = pneg %p35
      %p42 = scmp.eq.s32.totalorder %s14, 1
      %p43 = por %p41, %p42
      %p44 = scmp.ne.s32.totalorder %s36, %s39
      %p45 = scmp.eq.s32.totalorder %s14, 0
      %p46 = por %p44, %p45
      %p47 = scmp.ne.s32.totalorder %s36, %s39
      %p48 = scmp.eq.s32.totalorder %s19, 1
      %p49 = por %p47, %p48
      %p50 = scmp.ne.s32.totalorder %s39, %s40
      %p51 = scmp.eq.s32.totalorder %s19, 0
      %p52 = por %p50, %p51
      %p53 = scmp.ne.s32.totalorder %s39, %s40
      %p54 = scmp.eq.s32.totalorder %s20, 1
      %p55 = por %p53, %p54
      %p57 = scmp.ne.s32.totalorder %s40, %s56
      %p58 = scmp.eq.s32.totalorder %s20, 0
      %p59 = por %p57, %p58
      %s60 = ssub.s32 %s21, %s33
      %p61 = scmp.eq.s32.totalorder %s60, 0
      %s63 = sadd.s32 %s62, 1
      %s64 = scalar_select %p61, %s62, %s63
      %p67 = pneg %p61
      %p68 = scmp.eq.s32.totalorder %s14, 1
      %p69 = por %p67, %p68
      %p70 = scmp.ne.s32.totalorder %s62, %s65
      %p71 = scmp.eq.s32.totalorder %s14, 0
      %p72 = por %p70, %p71
      %p73 = scmp.ne.s32.totalorder %s62, %s65
      %p74 = scmp.eq.s32.totalorder %s19, 1
      %p75 = por %p73, %p74
      %p76 = scmp.ne.s32.totalorder %s65, %s66
      %p77 = scmp.eq.s32.totalorder %s19, 0
      %p78 = por %p76, %p77
      %p79 = scmp.ne.s32.totalorder %s65, %s66
      %p80 = scmp.eq.s32.totalorder %s20, 1
      %p81 = por %p79, %p80
      %p83 = scmp.ne.s32.totalorder %s66, %s82
      %p84 = scmp.eq.s32.totalorder %s20, 0
      %p85 = por %p83, %p84
      %s86 = ssub.s32 %s22, %s29
      %p87 = scmp.eq.s32.totalorder %s86, 0
      %s89 = sadd.s32 %s88, 1
      %s90 = scalar_select %p87, %s88, %s89
      %p93 = pneg %p87
      %p94 = scmp.eq.s32.totalorder %s14, 1
      %p95 = por %p93, %p94
      %p96 = scmp.ne.s32.totalorder %s88, %s91
      %p97 = scmp.eq.s32.totalorder %s14, 0
      %p98 = por %p96, %p97
      %p99 = scmp.ne.s32.totalorder %s88, %s91
      %p100 = scmp.eq.s32.totalorder %s19, 1
      %p101 = por %p99, %p100
      %p102 = scmp.ne.s32.totalorder %s91, %s92
      %p103 = scmp.eq.s32.totalorder %s19, 0
      %p104 = por %p102, %p103
      %p105 = scmp.ne.s32.totalorder %s91, %s92
      %p106 = scmp.eq.s32.totalorder %s20, 1
      %p107 = por %p105, %p106
      %p109 = scmp.ne.s32.totalorder %s92, %s108
      %p110 = scmp.eq.s32.totalorder %s20, 0
      %p111 = por %p109, %p110
      %s113 = sadd.s32 %s112, 1
      %p116 = scmp.eq.s32.totalorder %s14, 1
      %p117 = scmp.ne.s32.totalorder %s112, %s114
      %p118 = scmp.eq.s32.totalorder %s14, 0
      %p119 = por %p117, %p118
      %p120 = scmp.ne.s32.totalorder %s112, %s114
      %p121 = scmp.eq.s32.totalorder %s19, 1
      %p122 = por %p120, %p121
      %p123 = scmp.ne.s32.totalorder %s114, %s115
      %p124 = scmp.eq.s32.totalorder %s19, 0
      %p125 = por %p123, %p124
      %p126 = scmp.ne.s32.totalorder %s114, %s115
      %p127 = scmp.eq.s32.totalorder %s20, 1
      %p128 = por %p126, %p127
      %p130 = scmp.ne.s32.totalorder %s115, %s129
      %p131 = scmp.eq.s32.totalorder %s20, 0
      %p132 = por %p130, %p131
      %s134 = sadd.s32 %s133, 1
      %p137 = scmp.eq.s32.totalorder %s14, 1
      %p138 = scmp.ne.s32.totalorder %s133, %s135
      %p139 = scmp.eq.s32.totalorder %s14, 0
      %p140 = por %p138, %p139
      %p141 = scmp.ne.s32.totalorder %s133, %s135
      %p142 = scmp.eq.s32.totalorder %s19, 1
      %p143 = por %p141, %p142
      %p144 = scmp.ne.s32.totalorder %s135, %s136
      %p145 = scmp.eq.s32.totalorder %s19, 0
      %p146 = por %p144, %p145
      %p147 = scmp.ne.s32.totalorder %s135, %s136
      %p148 = scmp.eq.s32.totalorder %s20, 1
      %p149 = por %p147, %p148
      %p151 = scmp.ne.s32.totalorder %s136, %s150
      %p152 = scmp.eq.s32.totalorder %s20, 0
      %p153 = por %p151, %p152
      %s155 = sadd.s32 %s154, 1
      %p158 = scmp.eq.s32.totalorder %s14, 1
      %p159 = scmp.ne.s32.totalorder %s154, %s156
      %p160 = scmp.eq.s32.totalorder %s14, 0
      %p161 = por %p159, %p160
      %p162 = scmp.ne.s32.totalorder %s154, %s156
      %p163 = scmp.eq.s32.totalorder %s19, 1
      %p164 = por %p162, %p163
      %p165 = scmp.ne.s32.totalorder %s156, %s157
      %p166 = scmp.eq.s32.totalorder %s19, 0
      %p167 = por %p165, %p166
      %p168 = scmp.ne.s32.totalorder %s156, %s157
      %p169 = scmp.eq.s32.totalorder %s20, 1
      %p170 = por %p168, %p169
      %p172 = scmp.ne.s32.totalorder %s157, %s171
      %p173 = scmp.eq.s32.totalorder %s20, 0
      %p174 = por %p172, %p173
      %s175 = ssub.s32 %s21, %s33
      %p176 = scmp.eq.s32.totalorder %s175, 0
      %s178 = sadd.s32 %s177, 1
      %s179 = scalar_select %p176, %s177, %s178
      %p182 = pneg %p176
      %p183 = scmp.eq.s32.totalorder %s14, 1
      %p184 = por %p182, %p183
      %p185 = scmp.ne.s32.totalorder %s177, %s180
      %p186 = scmp.eq.s32.totalorder %s14, 0
      %p187 = por %p185, %p186
      %p188 = scmp.ne.s32.totalorder %s177, %s180
      %p189 = scmp.eq.s32.totalorder %s19, 1
      %p190 = por %p188, %p189
      %p191 = scmp.ne.s32.totalorder %s180, %s181
      %p192 = scmp.eq.s32.totalorder %s19, 0
      %p193 = por %p191, %p192
      %p194 = scmp.ne.s32.totalorder %s180, %s181
      %p195 = scmp.eq.s32.totalorder %s20, 1
      %p196 = por %p194, %p195
      %p198 = scmp.ne.s32.totalorder %s181, %s197
      %p199 = scmp.eq.s32.totalorder %s20, 0
      %p200 = por %p198, %p199
      %p201 = scmp.le.s32.totalorder 1, %s14
      %p202 = scmp.lt.s32.totalorder %s14, 3
      %p203 = pnand %p201, %p202
      %p204 = pneg %p203
      // Predicated region
      $region9: #{tpu_custom_call.1} parent=5 // pred_check
        _
      $region10: #{tpu_custom_call.1} parent=5 // pred_check_branch
        %206 = sbr.rel (%p203) target = $region12
      $region11: #{tpu_custom_call.1} parent=5 // pred_region
        %s207 = ssub.s32 %s14, 1
        // Predicated region
        $region13: #{tpu_custom_call.1} parent=11 // pred_check
          %p208 = pneg %p52
        $region14: #{tpu_custom_call.1} parent=11 // pred_check_branch
          %210 = sbr.rel (%p208) target = $region16
        $region15: #{tpu_custom_call.1} parent=11 // pred_region
          %p211 = scmp.lt.s32.totalorder %s23, 0
          %s212 = scalar_select %p211, %s23, 0
          %s213 = scalar_lea.vmem %s0, %s212
        $region16: #{tpu_custom_call.1} parent=11 // pred_fallthru
          _
        // Predicated region
        $region17: #{tpu_custom_call.1} parent=11 // pred_check
          %p214 = pneg %p78
        $region18: #{tpu_custom_call.1} parent=11 // pred_check_branch
          %216 = sbr.rel (%p214) target = $region20
        $region19: #{tpu_custom_call.1} parent=11 // pred_region
          %p217 = scmp.lt.s32.totalorder %s23, 0
          %s218 = scalar_select %p217, %s23, 0
          %s219 = scalar_lea.vmem %s1, %s218
        $region20: #{tpu_custom_call.1} parent=11 // pred_fallthru
          _
        // Predicated region
        $region21: #{tpu_custom_call.1} parent=11 // pred_check
          %p220 = pneg %p125
        $region22: #{tpu_custom_call.1} parent=11 // pred_check_branch
          %222 = sbr.rel (%p220) target = $region24
        $region23: #{tpu_custom_call.1} parent=11 // pred_region
          %s224 = ssub.s32 1024, 1024
          %225 = vsyncadd [#allocation4], %s224
          %s226 = sshll.u32 [#allocation3], 4
          %s227 = int_to_ptr.vmem [resolvable:$true] %s226
          %232 = dma.hbm_to_vmem [thread:$0]  %s3, 1024, %s227, [#allocation4], 64, 64, 4
        $region24: #{tpu_custom_call.1} parent=11 // pred_fallthru
          _
        // Predicated region
        $region25: #{tpu_custom_call.1} parent=11 // pred_check
          %p233 = pneg %p146
        $region26: #{tpu_custom_call.1} parent=11 // pred_check_branch
          %235 = sbr.rel (%p233) target = $region28
        $region27: #{tpu_custom_call.1} parent=11 // pred_region
          _
        $region28: #{tpu_custom_call.1} parent=11 // pred_fallthru
          _
        // Predicated region
        $region29: #{tpu_custom_call.1} parent=11 // pred_check
          %p236 = pneg %p167
        $region30: #{tpu_custom_call.1} parent=11 // pred_check_branch
          %238 = sbr.rel (%p236) target = $region32
        $region31: #{tpu_custom_call.1} parent=11 // pred_region
          _
        $region32: #{tpu_custom_call.1} parent=11 // pred_fallthru
          _
      $region12: #{tpu_custom_call.1} parent=5 // pred_fallthru
        _
      %p239 = scmp.lt.s32.totalorder %s14, 2
      // Predicated region
      $region33: #{tpu_custom_call.1} parent=5 // pred_check
        %p240 = pneg %p239
      $region34: #{tpu_custom_call.1} parent=5 // pred_check_branch
        %242 = sbr.rel (%p240) target = $region36
      $region35: #{tpu_custom_call.1} parent=5 // pred_region
        // Predicated region
        $region37: #{tpu_custom_call.1} parent=35 // pred_check
          %p243 = pneg %p98
        $region38: #{tpu_custom_call.1} parent=35 // pred_check_branch
          %245 = sbr.rel (%p243) target = $region40
        $region39: #{tpu_custom_call.1} parent=35 // pred_region
          %p246 = scmp.lt.s32.totalorder %s22, 1
          %s247 = scalar_select %p246, %s22, 1
          %s248 = scalar_lea.vmem %s2, %s247
        $region40: #{tpu_custom_call.1} parent=35 // pred_fallthru
          _
      $region36: #{tpu_custom_call.1} parent=5 // pred_fallthru
        _
      %p249 = scmp.le.s32.totalorder 1, %s14
      %p250 = scmp.lt.s32.totalorder %s14, 3
      %p251 = pnand %p249, %p250
      %p252 = pneg %p251
      // Predicated region
      $region41: #{tpu_custom_call.1} parent=5 // pred_check
        _
      $region42: #{tpu_custom_call.1} parent=5 // pred_check_branch
        %254 = sbr.rel (%p251) target = $region44
      $region43: #{tpu_custom_call.1} parent=5 // pred_region
        %s255 = ssub.s32 %s14, 1
        // Predicated region
        $region45: #{tpu_custom_call.1} parent=43 // pred_check
          %p256 = pneg %p125
        $region46: #{tpu_custom_call.1} parent=43 // pred_check_branch
          %258 = sbr.rel (%p256) target = $region48
        $region47: #{tpu_custom_call.1} parent=43 // pred_region
          %259 = dma.done [#allocation4], 1024
        $region48: #{tpu_custom_call.1} parent=43 // pred_fallthru
          _
        %p260 = scmp.lt.s32.totalorder %s23, 0
        %s261 = scalar_select %p260, %s23, 0
        %s262 = scalar_lea.vmem %s0, %s261
        %p263 = pneg %p52
        %p264 = pneg %p49
        %p265 = scmp.lt.s32.totalorder %s23, 0
        %s266 = scalar_select %p265, %s23, 0
        %s267 = scalar_lea.vmem %s1, %s266
        %p268 = pneg %p78
        %p269 = pneg %p75
        %p270 = scmp.lt.s32.totalorder %s24, 1
        %s271 = scalar_select %p270, %s24, 1
        %s272 = scalar_lea.vmem %s2, %s271
        %p273 = pneg %p104
        %p274 = pneg %p101
        %p275 = pneg %p125
        %p276 = pneg %p122
        %p277 = pneg %p146
        %p278 = pneg %p143
        %p279 = pneg %p167
        %p280 = pneg %p164
        %p281 = pneg %p193
        %p282 = pneg %p190
        %p283 = scmp.lt.s32.totalorder %s23, 0
        %s284 = scalar_select %p283, %s23, 0
        %s285 = scalar_lea.vmem %s0, %s284
        %p286 = scmp.lt.s32.totalorder %s23, 0
        %s287 = scalar_select %p286, %s23, 0
        %s288 = scalar_lea.vmem %s1, %s287
        %p289 = scmp.lt.s32.totalorder %s24, 1
        %s290 = scalar_select %p289, %s24, 1
        %s291 = scalar_lea.vmem %s2, %s290
        %p293 = scmp.eq.s32.totalorder %s24, 0
        // Predicated region
        $region49: #{tpu_custom_call.1} parent=43 // pred_check
          %p294 = pneg %p293
        $region50: #{tpu_custom_call.1} parent=43 // pred_check_branch
          %296 = sbr.rel (%p294) target = $region52
        $region51: #{tpu_custom_call.1} parent=43 // pred_region
          %297 = vst [vmem:[#allocation2] sm:$0xff] 0.0
          %298 = vst [vmem:[#allocation2 + $0x8] sm:$0xff] 0.0
          %299 = vst [vmem:[#allocation2 + $0x10] sm:$0xff] 0.0
          %300 = vst [vmem:[#allocation2 + $0x18] sm:$0xff] 0.0
          %301 = vst [vmem:[#allocation2 + $0x20] sm:$0xff] 0.0
          %302 = vst [vmem:[#allocation2 + $0x28] sm:$0xff] 0.0
          %303 = vst [vmem:[#allocation2 + $0x30] sm:$0xff] 0.0
          %304 = vst [vmem:[#allocation2 + $0x38] sm:$0xff] 0.0
          %305 = vst [vmem:[#allocation2 + $0x40] sm:$0xff] 0.0
          %306 = vst [vmem:[#allocation2 + $0x48] sm:$0xff] 0.0
          %307 = vst [vmem:[#allocation2 + $0x50] sm:$0xff] 0.0
          %308 = vst [vmem:[#allocation2 + $0x58] sm:$0xff] 0.0
          %309 = vst [vmem:[#allocation2 + $0x60] sm:$0xff] 0.0
          %310 = vst [vmem:[#allocation2 + $0x68] sm:$0xff] 0.0
          %311 = vst [vmem:[#allocation2 + $0x70] sm:$0xff] 0.0
          %312 = vst [vmem:[#allocation2 + $0x78] sm:$0xff] 0.0
        $region52: #{tpu_custom_call.1} parent=43 // pred_fallthru
          _
        %v313 = vld [vmem:[%s285] sm:$0x1]
        %v314 = vld [vmem:[%s288] sm:$0x1]
        %v315 = vld [vmem:[%s291] sm:$0x1]
        %v316 = vlaneseq
        %v317 = vshrl.u32 %v316, 7
        %v318 = vadd.s32 %v317, 8
        %v319 = vadd.s32 %v317, 16
        %v320 = vadd.s32 %v317, 24
        %v321 = vadd.s32 %v317, 32
        %v322 = vadd.s32 %v317, 40
        %v323 = vadd.s32 %v317, 48
        %v324 = vadd.s32 %v317, 56
        %v325 = vadd.s32 %v317, 64
        %v326 = vadd.s32 %v317, 72
        %v327 = vadd.s32 %v317, 80
        %v328 = vadd.s32 %v317, 88
        %v329 = vadd.s32 %v317, 96
        %v330 = vadd.s32 %v317, 104
        %v331 = vadd.s32 %v317, 112
        %v332 = vadd.s32 %v317, 120
        %s333 = smul.u32 %s24, 128
        %v334 = vstv %s333
        %v335 = vadd.s32 %v317, %v334
        %v336 = vadd.s32 %v318, %v334
        %v337 = vadd.s32 %v319, %v334
        %v338 = vadd.s32 %v320, %v334
        %v339 = vadd.s32 %v321, %v334
        %v340 = vadd.s32 %v322, %v334
        %v341 = vadd.s32 %v323, %v334
        %v342 = vadd.s32 %v324, %v334
        %v343 = vadd.s32 %v325, %v334
        %v344 = vadd.s32 %v326, %v334
        %v345 = vadd.s32 %v327, %v334
        %v346 = vadd.s32 %v328, %v334
        %v347 = vadd.s32 %v329, %v334
        %v348 = vadd.s32 %v330, %v334
        %v349 = vadd.s32 %v331, %v334
        %v350 = vadd.s32 %v332, %v334
        %v351 = vlaneseq
        %v352 = vshrl.u32 %v351, 7
        %v353 = vsub.s32 0, %v352
        %v354 = vrot.slane %v313, %v353
        %vm355 = vcmp.ge.s32.totalorder %v335, %v354
        %vm356 = vcmp.ge.s32.totalorder %v336, %v354
        %vm357 = vcmp.ge.s32.totalorder %v337, %v354
        %vm358 = vcmp.ge.s32.totalorder %v338, %v354
        %vm359 = vcmp.ge.s32.totalorder %v339, %v354
        %vm360 = vcmp.ge.s32.totalorder %v340, %v354
        %vm361 = vcmp.ge.s32.totalorder %v341, %v354
        %vm362 = vcmp.ge.s32.totalorder %v342, %v354
        %vm363 = vcmp.ge.s32.totalorder %v343, %v354
        %vm364 = vcmp.ge.s32.totalorder %v344, %v354
        %vm365 = vcmp.ge.s32.totalorder %v345, %v354
        %vm366 = vcmp.ge.s32.totalorder %v346, %v354
        %vm367 = vcmp.ge.s32.totalorder %v347, %v354
        %vm368 = vcmp.ge.s32.totalorder %v348, %v354
        %vm369 = vcmp.ge.s32.totalorder %v349, %v354
        %vm370 = vcmp.ge.s32.totalorder %v350, %v354
        %v371 = vlaneseq
        %v372 = vshrl.u32 %v371, 7
        %v373 = vsub.s32 0, %v372
        %v374 = vrot.slane %v314, %v373
        %vm375 = vcmp.lt.s32.totalorder %v335, %v374
        %vm376 = vcmp.lt.s32.totalorder %v336, %v374
        %vm377 = vcmp.lt.s32.totalorder %v337, %v374
        %vm378 = vcmp.lt.s32.totalorder %v338, %v374
        %vm379 = vcmp.lt.s32.totalorder %v339, %v374
        %vm380 = vcmp.lt.s32.totalorder %v340, %v374
        %vm381 = vcmp.lt.s32.totalorder %v341, %v374
        %vm382 = vcmp.lt.s32.totalorder %v342, %v374
        %vm383 = vcmp.lt.s32.totalorder %v343, %v374
        %vm384 = vcmp.lt.s32.totalorder %v344, %v374
        %vm385 = vcmp.lt.s32.totalorder %v345, %v374
        %vm386 = vcmp.lt.s32.totalorder %v346, %v374
        %vm387 = vcmp.lt.s32.totalorder %v347, %v374
        %vm388 = vcmp.lt.s32.totalorder %v348, %v374
        %vm389 = vcmp.lt.s32.totalorder %v349, %v374
        %vm390 = vcmp.lt.s32.totalorder %v350, %v374
        %vm391 = vmand %vm355, %vm375
        %vm392 = vmand %vm356, %vm376
        %vm393 = vmand %vm357, %vm377
        %vm394 = vmand %vm358, %vm378
        %vm395 = vmand %vm359, %vm379
        %vm396 = vmand %vm360, %vm380
        %vm397 = vmand %vm361, %vm381
        %vm398 = vmand %vm362, %vm382
        %vm399 = vmand %vm363, %vm383
        %vm400 = vmand %vm364, %vm384
        %vm401 = vmand %vm365, %vm385
        %vm402 = vmand %vm366, %vm386
        %vm403 = vmand %vm367, %vm387
        %vm404 = vmand %vm368, %vm388
        %vm405 = vmand %vm369, %vm389
        %vm406 = vmand %vm370, %vm390
        %v407 = vsel %vm391, 1, 0
        %v408 = vsel %vm392, 1, 0
        %v409 = vsel %vm393, 1, 0
        %v410 = vsel %vm394, 1, 0
        %v411 = vsel %vm395, 1, 0
        %v412 = vsel %vm396, 1, 0
        %v413 = vsel %vm397, 1, 0
        %v414 = vsel %vm398, 1, 0
        %v415 = vsel %vm399, 1, 0
        %v416 = vsel %vm400, 1, 0
        %v417 = vsel %vm401, 1, 0
        %v418 = vsel %vm402, 1, 0
        %v419 = vsel %vm403, 1, 0
        %v420 = vsel %vm404, 1, 0
        %v421 = vsel %vm405, 1, 0
        %v422 = vsel %vm406, 1, 0
        %v423 = vcvt.s32.f32 %v407
        %v424 = vcvt.s32.f32 %v408
        %v425 = vcvt.s32.f32 %v409
        %v426 = vcvt.s32.f32 %v410
        %v427 = vcvt.s32.f32 %v411
        %v428 = vcvt.s32.f32 %v412
        %v429 = vcvt.s32.f32 %v413
        %v430 = vcvt.s32.f32 %v414
        %v431 = vcvt.s32.f32 %v415
        %v432 = vcvt.s32.f32 %v416
        %v433 = vcvt.s32.f32 %v417
        %v434 = vcvt.s32.f32 %v418
        %v435 = vcvt.s32.f32 %v419
        %v436 = vcvt.s32.f32 %v420
        %v437 = vcvt.s32.f32 %v421
        %v438 = vcvt.s32.f32 %v422
        %v439 = vpack.c.bf16 %v424, %v423
        %v440 = vpack.c.bf16 %v426, %v425
        %v441 = vpack.c.bf16 %v428, %v427
        %v442 = vpack.c.bf16 %v430, %v429
        %v443 = vpack.c.bf16 %v432, %v431
        %v444 = vpack.c.bf16 %v434, %v433
        %v445 = vpack.c.bf16 %v436, %v435
        %v446 = vpack.c.bf16 %v438, %v437
        %v447 = vlaneseq
        %v448 = vshrl.u32 %v447, 7
        %v449 = vsub.s32 0, %v448
        %v450 = vrot.slane %v315, %v449
        %vm451 = vcmp.eq.s32.totalorder %v317, %v450
        %vm452 = vcmp.eq.s32.totalorder %v318, %v450
        %vm453 = vcmp.eq.s32.totalorder %v319, %v450
        %vm454 = vcmp.eq.s32.totalorder %v320, %v450
        %vm455 = vcmp.eq.s32.totalorder %v321, %v450
        %vm456 = vcmp.eq.s32.totalorder %v322, %v450
        %vm457 = vcmp.eq.s32.totalorder %v323, %v450
        %vm458 = vcmp.eq.s32.totalorder %v324, %v450
        %vm459 = vcmp.eq.s32.totalorder %v325, %v450
        %vm460 = vcmp.eq.s32.totalorder %v326, %v450
        %vm461 = vcmp.eq.s32.totalorder %v327, %v450
        %vm462 = vcmp.eq.s32.totalorder %v328, %v450
        %vm463 = vcmp.eq.s32.totalorder %v329, %v450
        %vm464 = vcmp.eq.s32.totalorder %v330, %v450
        %vm465 = vcmp.eq.s32.totalorder %v331, %v450
        %vm466 = vcmp.eq.s32.totalorder %v332, %v450
        %v467 = vsel %vm451, 1, 0
        %v468 = vsel %vm452, 1, 0
        %v469 = vsel %vm453, 1, 0
        %v470 = vsel %vm454, 1, 0
        %v471 = vsel %vm455, 1, 0
        %v472 = vsel %vm456, 1, 0
        %v473 = vsel %vm457, 1, 0
        %v474 = vsel %vm458, 1, 0
        %v475 = vsel %vm459, 1, 0
        %v476 = vsel %vm460, 1, 0
        %v477 = vsel %vm461, 1, 0
        %v478 = vsel %vm462, 1, 0
        %v479 = vsel %vm463, 1, 0
        %v480 = vsel %vm464, 1, 0
        %v481 = vsel %vm465, 1, 0
        %v482 = vsel %vm466, 1, 0
        %v483 = vcvt.s32.f32 %v467
        %v484 = vcvt.s32.f32 %v468
        %v485 = vcvt.s32.f32 %v469
        %v486 = vcvt.s32.f32 %v470
        %v487 = vcvt.s32.f32 %v471
        %v488 = vcvt.s32.f32 %v472
        %v489 = vcvt.s32.f32 %v473
        %v490 = vcvt.s32.f32 %v474
        %v491 = vcvt.s32.f32 %v475
        %v492 = vcvt.s32.f32 %v476
        %v493 = vcvt.s32.f32 %v477
        %v494 = vcvt.s32.f32 %v478
        %v495 = vcvt.s32.f32 %v479
        %v496 = vcvt.s32.f32 %v480
        %v497 = vcvt.s32.f32 %v481
        %v498 = vcvt.s32.f32 %v482
        %v499 = vpack.c.bf16 %v484, %v483
        %v500 = vpack.c.bf16 %v486, %v485
        %v501 = vpack.c.bf16 %v488, %v487
        %v502 = vpack.c.bf16 %v490, %v489
        %v503 = vpack.c.bf16 %v492, %v491
        %v504 = vpack.c.bf16 %v494, %v493
        %v505 = vpack.c.bf16 %v496, %v495
        %v506 = vpack.c.bf16 %v498, %v497
        %v507 = vld [vmem:[#allocation2] sm:$0xff]
        %v508 = vld [vmem:[#allocation2 + $0x8] sm:$0xff]
        %v509 = vld [vmem:[#allocation2 + $0x10] sm:$0xff]
        %v510 = vld [vmem:[#allocation2 + $0x18] sm:$0xff]
        %v511 = vld [vmem:[#allocation2 + $0x20] sm:$0xff]
        %v512 = vld [vmem:[#allocation2 + $0x28] sm:$0xff]
        %v513 = vld [vmem:[#allocation2 + $0x30] sm:$0xff]
        %v514 = vld [vmem:[#allocation2 + $0x38] sm:$0xff]
        %v515 = vld [vmem:[#allocation2 + $0x40] sm:$0xff]
        %v516 = vld [vmem:[#allocation2 + $0x48] sm:$0xff]
        %v517 = vld [vmem:[#allocation2 + $0x50] sm:$0xff]
        %v518 = vld [vmem:[#allocation2 + $0x58] sm:$0xff]
        %v519 = vld [vmem:[#allocation2 + $0x60] sm:$0xff]
        %v520 = vld [vmem:[#allocation2 + $0x68] sm:$0xff]
        %v521 = vld [vmem:[#allocation2 + $0x70] sm:$0xff]
        %v522 = vld [vmem:[#allocation2 + $0x78] sm:$0xff]
        %523 = vmatprep.subr.bf16.mxu0 0
        %524 = vmatpush1.bf16.msra.mxu0 %v439
        %525 = vmatprep.subr.bf16.mxu0 0
        %526 = vmatpush1.bf16.msra.mxu0 %v440
        %527 = vmatprep.subr.bf16.mxu0 0
        %528 = vmatpush1.bf16.msra.mxu0 %v441
        %529 = vmatprep.subr.bf16.mxu0 0
        %530 = vmatpush1.bf16.msra.mxu0 %v442
        %531 = vmatprep.subr.bf16.mxu0 0
        %532 = vmatpush1.bf16.msra.mxu0 %v443
        %533 = vmatprep.subr.bf16.mxu0 0
        %534 = vmatpush1.bf16.msra.mxu0 %v444
        %535 = vmatprep.subr.bf16.mxu0 0
        %536 = vmatpush1.bf16.msra.mxu0 %v445
        %537 = vmatprep.subr.bf16.mxu0 0
        %538 = vmatpush1.bf16.msra.mxu0 %v446
        %539 = vmatprep.subr.bf16.mxu0 0
        %540 = vmatpush1.bf16.msra.mxu0 0
        %541 = vmatprep.subr.bf16.mxu0 0
        %542 = vmatpush1.bf16.msra.mxu0 0
        %543 = vmatprep.subr.bf16.mxu0 0
        %544 = vmatpush1.bf16.msra.mxu0 0
        %545 = vmatprep.subr.bf16.mxu0 0
        %546 = vmatpush1.bf16.msra.mxu0 0
        %547 = vmatprep.subr.bf16.mxu0 0
        %548 = vmatpush1.bf16.msra.mxu0 0
        %549 = vmatprep.subr.bf16.mxu0 0
        %550 = vmatpush1.bf16.msra.mxu0 0
        %551 = vmatprep.subr.bf16.mxu0 0
        %552 = vmatpush1.bf16.msra.mxu0 0
        %553 = vmatprep.subr.bf16.mxu0 0
        %554 = vmatpush1.bf16.msra.mxu0 0
        %555 = vmatprep.mubr.bf16.mxu0 0
        %556 = vmatmul.mubr.bf16.gmra.mrb[0].mxu0 %v499
        %v557 = vpop.f32.mrb[0].mxu0
        %v558 = vadd.f32 0.0, %v557
        %v559 = vpop.f32.mrb[0].mxu0
        %v560 = vpop.f32.mrb[0].mxu0
        %v561 = vadd.f32 0.0, %v560
        %v562 = vpop.f32.mrb[0].mxu0
        %563 = vmatprep.mubr.bf16.mxu0 0
        %564 = vmatmul.mubr.bf16.gmra.mrb[0].mxu0 %v500
        %v565 = vpop.f32.mrb[0].mxu0
        %v566 = vadd.f32 0.0, %v565
        %v567 = vpop.f32.mrb[0].mxu0
        %v568 = vpop.f32.mrb[0].mxu0
        %v569 = vadd.f32 0.0, %v568
        %v570 = vpop.f32.mrb[0].mxu0
        %571 = vmatprep.mubr.bf16.mxu0 0
        %572 = vmatmul.mubr.bf16.gmra.mrb[0].mxu0 %v501
        %v573 = vpop.f32.mrb[0].mxu0
        %v574 = vadd.f32 0.0, %v573
        %v575 = vpop.f32.mrb[0].mxu0
        %v576 = vpop.f32.mrb[0].mxu0
        %v577 = vadd.f32 0.0, %v576
        %v578 = vpop.f32.mrb[0].mxu0
        %579 = vmatprep.mubr.bf16.mxu0 0
        %580 = vmatmul.mubr.bf16.gmra.mrb[0].mxu0 %v502
        %v581 = vpop.f32.mrb[0].mxu0
        %v582 = vadd.f32 0.0, %v581
        %v583 = vpop.f32.mrb[0].mxu0
        %v584 = vpop.f32.mrb[0].mxu0
        %v585 = vadd.f32 0.0, %v584
        %v586 = vpop.f32.mrb[0].mxu0
        %587 = vmatprep.mubr.bf16.mxu0 0
        %588 = vmatmul.mubr.bf16.gmra.mrb[0].mxu0 %v503
        %v589 = vpop.f32.mrb[0].mxu0
        %v590 = vadd.f32 0.0, %v589
        %v591 = vpop.f32.mrb[0].mxu0
        %v592 = vpop.f32.mrb[0].mxu0
        %v593 = vadd.f32 0.0, %v592
        %v594 = vpop.f32.mrb[0].mxu0
        %595 = vmatprep.mubr.bf16.mxu0 0
        %596 = vmatmul.mubr.bf16.gmra.mrb[0].mxu0 %v504
        %v597 = vpop.f32.mrb[0].mxu0
        %v598 = vadd.f32 0.0, %v597
        %v599 = vpop.f32.mrb[0].mxu0
        %v600 = vpop.f32.mrb[0].mxu0
        %v601 = vadd.f32 0.0, %v600
        %v602 = vpop.f32.mrb[0].mxu0
        %603 = vmatprep.mubr.bf16.mxu0 0
        %604 = vmatmul.mubr.bf16.gmra.mrb[0].mxu0 %v505
        %v605 = vpop.f32.mrb[0].mxu0
        %v606 = vadd.f32 0.0, %v605
        %v607 = vpop.f32.mrb[0].mxu0
        %v608 = vpop.f32.mrb[0].mxu0
        %v609 = vadd.f32 0.0, %v608
        %v610 = vpop.f32.mrb[0].mxu0
        %611 = vmatprep.mubr.bf16.mxu0 0
        %612 = vmatmul.mubr.bf16.gmra.mrb[0].mxu0 %v506
        %v613 = vpop.f32.mrb[0].mxu0
        %v614 = vadd.f32 0.0, %v613
        %v615 = vpop.f32.mrb[0].mxu0
        %v616 = vpop.f32.mrb[0].mxu0
        %v617 = vadd.f32 0.0, %v616
        %v618 = vpop.f32.mrb[0].mxu0
        %619 = vdwg.mxu0
        %v620 = vadd.f32 %v507, %v558
        %v621 = vadd.f32 %v508, %v561
        %v622 = vadd.f32 %v509, %v566
        %v623 = vadd.f32 %v510, %v569
        %v624 = vadd.f32 %v511, %v574
        %v625 = vadd.f32 %v512, %v577
        %v626 = vadd.f32 %v513, %v582
        %v627 = vadd.f32 %v514, %v585
        %v628 = vadd.f32 %v515, %v590
        %v629 = vadd.f32 %v516, %v593
        %v630 = vadd.f32 %v517, %v598
        %v631 = vadd.f32 %v518, %v601
        %v632 = vadd.f32 %v519, %v606
        %v633 = vadd.f32 %v520, %v609
        %v634 = vadd.f32 %v521, %v614
        %v635 = vadd.f32 %v522, %v617
        %636 = vst [vmem:[#allocation2] sm:$0xff] %v620
        %637 = vst [vmem:[#allocation2 + $0x8] sm:$0xff] %v621
        %638 = vst [vmem:[#allocation2 + $0x10] sm:$0xff] %v622
        %639 = vst [vmem:[#allocation2 + $0x18] sm:$0xff] %v623
        %640 = vst [vmem:[#allocation2 + $0x20] sm:$0xff] %v624
        %641 = vst [vmem:[#allocation2 + $0x28] sm:$0xff] %v625
        %642 = vst [vmem:[#allocation2 + $0x30] sm:$0xff] %v626
        %643 = vst [vmem:[#allocation2 + $0x38] sm:$0xff] %v627
        %644 = vst [vmem:[#allocation2 + $0x40] sm:$0xff] %v628
        %645 = vst [vmem:[#allocation2 + $0x48] sm:$0xff] %v629
        %646 = vst [vmem:[#allocation2 + $0x50] sm:$0xff] %v630
        %647 = vst [vmem:[#allocation2 + $0x58] sm:$0xff] %v631
        %648 = vst [vmem:[#allocation2 + $0x60] sm:$0xff] %v632
        %649 = vst [vmem:[#allocation2 + $0x68] sm:$0xff] %v633
        %650 = vst [vmem:[#allocation2 + $0x70] sm:$0xff] %v634
        %651 = vst [vmem:[#allocation2 + $0x78] sm:$0xff] %v635
        %p652 = scmp.eq.s32.totalorder %s24, 1
        // Predicated region
        $region53: #{tpu_custom_call.1} parent=43 // pred_check
          %p653 = pneg %p652
        $region54: #{tpu_custom_call.1} parent=43 // pred_check_branch
          %655 = sbr.rel (%p653) target = $region56
        $region55: #{tpu_custom_call.1} parent=43 // pred_region
          %v656 = vsub.s32 %v314, %v313
          %v657 = vcvt.s32.f32 %v656
          %vm658 = vcmp.gt.f32.partialorder %v657, 0.0
          %v659 = vrcp.pop %v657
          %v660 = vmul.f32 1.0, %v659
          %v661 = vsel %vm658, %v660, 0.0
          %v662 = vld [vmem:[#allocation3] sm:$0xf]
          %v663 = vld [vmem:[#allocation3 + $0x4] sm:$0xf]
          %v664 = vld [vmem:[#allocation3 + $0x8] sm:$0xf]
          %v665 = vld [vmem:[#allocation3 + $0xc] sm:$0xf]
          %v666 = vld [vmem:[#allocation3 + $0x10] sm:$0xf]
          %v667 = vld [vmem:[#allocation3 + $0x14] sm:$0xf]
          %v668 = vld [vmem:[#allocation3 + $0x18] sm:$0xf]
          %v669 = vld [vmem:[#allocation3 + $0x1c] sm:$0xf]
          %v670 = vld [vmem:[#allocation3 + $0x20] sm:$0xf]
          %v671 = vld [vmem:[#allocation3 + $0x24] sm:$0xf]
          %v672 = vld [vmem:[#allocation3 + $0x28] sm:$0xf]
          %v673 = vld [vmem:[#allocation3 + $0x2c] sm:$0xf]
          %v674 = vld [vmem:[#allocation3 + $0x30] sm:$0xf]
          %v675 = vld [vmem:[#allocation3 + $0x34] sm:$0xf]
          %v676 = vld [vmem:[#allocation3 + $0x38] sm:$0xf]
          %v677 = vld [vmem:[#allocation3 + $0x3c] sm:$0xf]
          %v678 = vld [vmem:[#allocation2] sm:$0xff]
          %v679 = vld [vmem:[#allocation2 + $0x8] sm:$0xff]
          %v680 = vld [vmem:[#allocation2 + $0x10] sm:$0xff]
          %v681 = vld [vmem:[#allocation2 + $0x18] sm:$0xff]
          %v682 = vld [vmem:[#allocation2 + $0x20] sm:$0xff]
          %v683 = vld [vmem:[#allocation2 + $0x28] sm:$0xff]
          %v684 = vld [vmem:[#allocation2 + $0x30] sm:$0xff]
          %v685 = vld [vmem:[#allocation2 + $0x38] sm:$0xff]
          %v686 = vld [vmem:[#allocation2 + $0x40] sm:$0xff]
          %v687 = vld [vmem:[#allocation2 + $0x48] sm:$0xff]
          %v688 = vld [vmem:[#allocation2 + $0x50] sm:$0xff]
          %v689 = vld [vmem:[#allocation2 + $0x58] sm:$0xff]
          %v690 = vld [vmem:[#allocation2 + $0x60] sm:$0xff]
          %v691 = vld [vmem:[#allocation2 + $0x68] sm:$0xff]
          %v692 = vld [vmem:[#allocation2 + $0x70] sm:$0xff]
          %v693 = vld [vmem:[#allocation2 + $0x78] sm:$0xff]
          %v694 = vpack.c.bf16 %v679, %v678
          %v695 = vpack.c.bf16 %v681, %v680
          %v696 = vpack.c.bf16 %v683, %v682
          %v697 = vpack.c.bf16 %v685, %v684
          %v698 = vpack.c.bf16 %v687, %v686
          %v699 = vpack.c.bf16 %v689, %v688
          %v700 = vpack.c.bf16 %v691, %v690
          %v701 = vpack.c.bf16 %v693, %v692
          %v718 = vunpack.c.l.b16 %v662
          %v719 = vunpack.c.l.b16 %v663
          %v720 = vunpack.c.l.b16 %v664
          %v721 = vunpack.c.l.b16 %v665
          %v722 = vunpack.c.l.b16 %v666
          %v723 = vunpack.c.l.b16 %v667
          %v724 = vunpack.c.l.b16 %v668
          %v725 = vunpack.c.l.b16 %v669
          %v726 = vunpack.c.l.b16 %v670
          %v727 = vunpack.c.l.b16 %v671
          %v728 = vunpack.c.l.b16 %v672
          %v729 = vunpack.c.l.b16 %v673
          %v730 = vunpack.c.l.b16 %v674
          %v731 = vunpack.c.l.b16 %v675
          %v732 = vunpack.c.l.b16 %v676
          %v733 = vunpack.c.l.b16 %v677
          %v734 = vpack.c.b16 %v719, %v718
          %v735 = vpack.c.b16 %v721, %v720
          %v736 = vpack.c.b16 %v723, %v722
          %v737 = vpack.c.b16 %v725, %v724
          %v738 = vpack.c.b16 %v727, %v726
          %v739 = vpack.c.b16 %v729, %v728
          %v740 = vpack.c.b16 %v731, %v730
          %v741 = vpack.c.b16 %v733, %v732
          %750 = vmatprep.subr.bf16.mxu0 0
          %751 = vmatpush1.bf16.msra.mxu0 %v694
          %752 = vmatprep.subr.bf16.mxu0 0
          %753 = vmatpush1.bf16.msra.mxu0 %v695
          %754 = vmatprep.subr.bf16.mxu0 0
          %755 = vmatpush1.bf16.msra.mxu0 %v696
          %756 = vmatprep.subr.bf16.mxu0 0
          %757 = vmatpush1.bf16.msra.mxu0 %v697
          %758 = vmatprep.subr.bf16.mxu0 0
          %759 = vmatpush1.bf16.msra.mxu0 %v698
          %760 = vmatprep.subr.bf16.mxu0 0
          %761 = vmatpush1.bf16.msra.mxu0 %v699
          %762 = vmatprep.subr.bf16.mxu0 0
          %763 = vmatpush1.bf16.msra.mxu0 %v700
          %764 = vmatprep.subr.bf16.mxu0 0
          %765 = vmatpush1.bf16.msra.mxu0 %v701
          %766 = vmatprep.subr.bf16.mxu0 0
          %767 = vmatpush1.bf16.msra.mxu0 0
          %768 = vmatprep.subr.bf16.mxu0 0
          %769 = vmatpush1.bf16.msra.mxu0 0
          %770 = vmatprep.subr.bf16.mxu0 0
          %771 = vmatpush1.bf16.msra.mxu0 0
          %772 = vmatprep.subr.bf16.mxu0 0
          %773 = vmatpush1.bf16.msra.mxu0 0
          %774 = vmatprep.subr.bf16.mxu0 0
          %775 = vmatpush1.bf16.msra.mxu0 0
          %776 = vmatprep.subr.bf16.mxu0 0
          %777 = vmatpush1.bf16.msra.mxu0 0
          %778 = vmatprep.subr.bf16.mxu0 0
          %779 = vmatpush1.bf16.msra.mxu0 0
          %780 = vmatprep.subr.bf16.mxu0 0
          %781 = vmatpush1.bf16.msra.mxu0 0
          %782 = vmatprep.mubr.bf16.mxu0 0
          %783 = vmatmul.mubr.bf16.gmra.mrb[0].mxu0 %v734
          %v784 = vpop.f32.mrb[0].mxu0
          %v785 = vadd.f32 0.0, %v784
          %v786 = vpop.f32.mrb[0].mxu0
          %v787 = vpop.f32.mrb[0].mxu0
          %v788 = vadd.f32 0.0, %v787
          %v789 = vpop.f32.mrb[0].mxu0
          %790 = vmatprep.mubr.bf16.mxu0 0
          %791 = vmatmul.mubr.bf16.gmra.mrb[0].mxu0 %v735
          %v792 = vpop.f32.mrb[0].mxu0
          %v793 = vadd.f32 0.0, %v792
          %v794 = vpop.f32.mrb[0].mxu0
          %v795 = vpop.f32.mrb[0].mxu0
          %v796 = vadd.f32 0.0, %v795
          %v797 = vpop.f32.mrb[0].mxu0
          %798 = vmatprep.mubr.bf16.mxu0 0
          %799 = vmatmul.mubr.bf16.gmra.mrb[0].mxu0 %v736
          %v800 = vpop.f32.mrb[0].mxu0
          %v801 = vadd.f32 0.0, %v800
          %v802 = vpop.f32.mrb[0].mxu0
          %v803 = vpop.f32.mrb[0].mxu0
          %v804 = vadd.f32 0.0, %v803
          %v805 = vpop.f32.mrb[0].mxu0
          %806 = vmatprep.mubr.bf16.mxu0 0
          %807 = vmatmul.mubr.bf16.gmra.mrb[0].mxu0 %v737
          %v808 = vpop.f32.mrb[0].mxu0
          %v809 = vadd.f32 0.0, %v808
          %v810 = vpop.f32.mrb[0].mxu0
          %v811 = vpop.f32.mrb[0].mxu0
          %v812 = vadd.f32 0.0, %v811
          %v813 = vpop.f32.mrb[0].mxu0
          %814 = vmatprep.mubr.bf16.mxu0 0
          %815 = vmatmul.mubr.bf16.gmra.mrb[0].mxu0 %v738
          %v816 = vpop.f32.mrb[0].mxu0
          %v817 = vadd.f32 0.0, %v816
          %v818 = vpop.f32.mrb[0].mxu0
          %v819 = vpop.f32.mrb[0].mxu0
          %v820 = vadd.f32 0.0, %v819
          %v821 = vpop.f32.mrb[0].mxu0
          %822 = vmatprep.mubr.bf16.mxu0 0
          %823 = vmatmul.mubr.bf16.gmra.mrb[0].mxu0 %v739
          %v824 = vpop.f32.mrb[0].mxu0
          %v825 = vadd.f32 0.0, %v824
          %v826 = vpop.f32.mrb[0].mxu0
          %v827 = vpop.f32.mrb[0].mxu0
          %v828 = vadd.f32 0.0, %v827
          %v829 = vpop.f32.mrb[0].mxu0
          %830 = vmatprep.mubr.bf16.mxu0 0
          %831 = vmatmul.mubr.bf16.gmra.mrb[0].mxu0 %v740
          %v832 = vpop.f32.mrb[0].mxu0
          %v833 = vadd.f32 0.0, %v832
          %v834 = vpop.f32.mrb[0].mxu0
          %v835 = vpop.f32.mrb[0].mxu0
          %v836 = vadd.f32 0.0, %v835
          %v837 = vpop.f32.mrb[0].mxu0
          %838 = vmatprep.mubr.bf16.mxu0 0
          %839 = vmatmul.mubr.bf16.gmra.mrb[0].mxu0 %v741
          %v840 = vpop.f32.mrb[0].mxu0
          %v841 = vadd.f32 0.0, %v840
          %v842 = vpop.f32.mrb[0].mxu0
          %v843 = vpop.f32.mrb[0].mxu0
          %v844 = vadd.f32 0.0, %v843
          %v845 = vpop.f32.mrb[0].mxu0
          %846 = vdwg.mxu0
          %v848 = vlaneseq
          %v849 = vshrl.u32 %v848, 7
          %v850 = vsub.s32 0, %v849
          %v851 = vrot.slane %v661, %v850
          %v853 = vmul.f32 %v785, %v851
          %v854 = vmul.f32 %v788, %v851
          %v855 = vmul.f32 %v793, %v851
          %v856 = vmul.f32 %v796, %v851
          %v857 = vmul.f32 %v801, %v851
          %v858 = vmul.f32 %v804, %v851
          %v859 = vmul.f32 %v809, %v851
          %v860 = vmul.f32 %v812, %v851
          %v861 = vmul.f32 %v817, %v851
          %v862 = vmul.f32 %v820, %v851
          %v863 = vmul.f32 %v825, %v851
          %v864 = vmul.f32 %v828, %v851
          %v865 = vmul.f32 %v833, %v851
          %v866 = vmul.f32 %v836, %v851
          %v867 = vmul.f32 %v841, %v851
          %v868 = vmul.f32 %v844, %v851
          %v869 = vld [vmem:[%s4] sm:$0xf]
          %v870 = vpack.c.bf16 %v854, %v853
          %v871 = vpack.c.bf16 %v856, %v855
          %v872 = vpack.c.bf16 %v858, %v857
          %v873 = vpack.c.bf16 %v860, %v859
          %v874 = vpack.c.bf16 %v862, %v861
          %v875 = vpack.c.bf16 %v864, %v863
          %v876 = vpack.c.bf16 %v866, %v865
          %v877 = vpack.c.bf16 %v868, %v867
          %v878 = vld [vmem:[%s5] sm:$0xff]
          %880 = vset.pattern.permute.xlu0 0
          %881 = vperm.xlu0 %880, %v878
          %v882 = vpop.permute.xlu0 %881
          %884 = vmatprep.subr.bf16.mxu0 0
          %885 = vmatpush1.bf16.msra.mxu0 %v870
          %886 = vmatprep.subr.bf16.mxu0 0
          %887 = vmatpush1.bf16.msra.mxu0 %v871
          %888 = vmatprep.subr.bf16.mxu0 0
          %889 = vmatpush1.bf16.msra.mxu0 %v872
          %890 = vmatprep.subr.bf16.mxu0 0
          %891 = vmatpush1.bf16.msra.mxu0 %v873
          %892 = vmatprep.subr.bf16.mxu0 0
          %893 = vmatpush1.bf16.msra.mxu0 %v874
          %894 = vmatprep.subr.bf16.mxu0 0
          %895 = vmatpush1.bf16.msra.mxu0 %v875
          %896 = vmatprep.subr.bf16.mxu0 0
          %897 = vmatpush1.bf16.msra.mxu0 %v876
          %898 = vmatprep.subr.bf16.mxu0 0
          %899 = vmatpush1.bf16.msra.mxu0 %v877
          %900 = vmatprep.subr.bf16.mxu0 0
          %901 = vmatpush1.bf16.msra.mxu0 0
          %902 = vmatprep.subr.bf16.mxu0 0
          %903 = vmatpush1.bf16.msra.mxu0 0
          %904 = vmatprep.subr.bf16.mxu0 0
          %905 = vmatpush1.bf16.msra.mxu0 0
          %906 = vmatprep.subr.bf16.mxu0 0
          %907 = vmatpush1.bf16.msra.mxu0 0
          %908 = vmatprep.subr.bf16.mxu0 0
          %909 = vmatpush1.bf16.msra.mxu0 0
          %910 = vmatprep.subr.bf16.mxu0 0
          %911 = vmatpush1.bf16.msra.mxu0 0
          %912 = vmatprep.subr.bf16.mxu0 0
          %913 = vmatpush1.bf16.msra.mxu0 0
          %914 = vmatprep.subr.bf16.mxu0 0
          %915 = vmatpush1.bf16.msra.mxu0 0
          %916 = vmatprep.mubr.bf16.mxu0 0
          %917 = vmatmul.mubr.bf16.gmra.mrb[0].mxu0 %v869
          %v918 = vpop.f32.mrb[0].mxu0
          %v919 = vadd.f32 %v882, %v918
          %v920 = vpop.f32.mrb[0].mxu0
          %v921 = vpop.f32.mrb[0].mxu0
          %v922 = vpop.f32.mrb[0].mxu0
          %923 = vdwg.mxu0
          %v924 = vrot.slane %v919, 4
          %v925 = vmax.f32 %v919, %v924
          %v926 = vrot.slane %v925, 2
          %v927 = vmax.f32 %v925, %v926
          %v928 = vrot.slane %v927, 1
          %v929 = vmax.f32 %v927, %v928
          %v930 = vsub.f32 %v919, %v929
          %v931 = vmul.f32 %v930, 1.442695
          %v932 = vpow.pop %v931
          %v933 = vrot.slane %v932, 4
          %v934 = vadd.f32 %v932, %v933
          %v935 = vrot.slane %v934, 2
          %v936 = vadd.f32 %v934, %v935
          %v937 = vrot.slane %v936, 1
          %v938 = vadd.f32 %v936, %v937
          %v939 = vrcp.pop %v938
          %v940 = vmul.f32 %v932, %v939
          %941 = vst [vmem:[#allocation6] sm:$0xff] %v940
        $region56: #{tpu_custom_call.1} parent=43 // pred_fallthru
          _
        // Predicated region
        $region57: #{tpu_custom_call.1} parent=43 // pred_check
          %p942 = pneg %p190
        $region58: #{tpu_custom_call.1} parent=43 // pred_check_branch
          %944 = sbr.rel (%p942) target = $region60
        $region59: #{tpu_custom_call.1} parent=43 // pred_region
          %s946 = ssub.s32 128, 128
          %947 = vsyncadd [#allocation5], %s946
          %s948 = smul.addr %s23, 128
          %s949 = scalar_lea.hbm %s6, %s948
          %s951 = sshll.u32 [#allocation6], 4
          %s952 = int_to_ptr.vmem [resolvable:$true] %s951
          %954 = dma.vmem_to_hbm [thread:$0]  %s952, 128, %s949, [#allocation5]
        $region60: #{tpu_custom_call.1} parent=43 // pred_fallthru
          _
        // Predicated region
        $region61: #{tpu_custom_call.1} parent=43 // pred_check
          %p955 = pneg %p190
        $region62: #{tpu_custom_call.1} parent=43 // pred_check_branch
          %957 = sbr.rel (%p955) target = $region64
        $region63: #{tpu_custom_call.1} parent=43 // pred_region
          %958 = dma.done [#allocation5], 128
        $region64: #{tpu_custom_call.1} parent=43 // pred_fallthru
          _
      $region44: #{tpu_custom_call.1} parent=5 // pred_fallthru
        _
      %p959 = scmp.le.s32.totalorder 2, %s14
      // Predicated region
      $region65: #{tpu_custom_call.1} parent=5 // pred_check
        %p960 = pneg %p959
      $region66: #{tpu_custom_call.1} parent=5 // pred_check_branch
        %962 = sbr.rel (%p960) target = $region68
      $region67: #{tpu_custom_call.1} parent=5 // pred_region
        %s963 = ssub.s32 %s14, 2
      $region68: #{tpu_custom_call.1} parent=5 // pred_fallthru
        _
    $region6: #{tpu_custom_call.1} parent=1 // loop_footer
      %s18 = sadd.s32 1, %s14
    $region7: #{tpu_custom_call.1} parent=1 // loop_footer_branch
      %13 = sbr.rel target = $region3
    $region8: #{tpu_custom_call.1} parent=1 // loop_exit
      _
    %964 = vsyncpa [#allocation4], 1
    %s965 = scalar_lea.sflag [#allocation4], 1
    %966 = vsyncpa %s965, 1
    %967 = vsyncpa [#allocation5], 1
    %s968 = scalar_lea.sflag [#allocation5], 1
    %969 = vsyncpa %s968, 1

</llo_original>
